<compile_context>
chip_gen: v6e
topology: v6e:2x2x1
jax: 0.10.0
libtpu: 0.0.40
codegen_flags: <defaults>
</compile_context>

<pallas_src>
import numpy as np
import jax
import jax.numpy as jnp
from jax import lax
from jax.experimental import pallas as pl
from jax.experimental.pallas import tpu as pltpu


_NOUT = 4          # [thrust, Mx, My, Mz]
_LANES = 128       # controllers per sublane row
_MAX_SUB_TILE = 256  # cap: 37 * 256 * 128 * 4 B ~ 4.9 MiB per input block (x2 buffers)


# ---------- 3-vector helpers: a vector = tuple of three (sub_tile, 128) slabs ----------
def _vadd(*vs):
    return tuple(sum(c) for c in zip(*vs))


def _vsub(a, b):
    return tuple(x - y for x, y in zip(a, b))


def _vscale(s, a):
    return tuple(s * x for x in a)


def _vneg(a):
    return tuple(-x for x in a)


def _vdot(a, b):
    return a[0] * b[0] + a[1] * b[1] + a[2] * b[2]


def _vcross(a, b):
    return (a[1] * b[2] - a[2] * b[1],
            a[2] * b[0] - a[0] * b[2],
            a[0] * b[1] - a[1] * b[0])


def _rnorm(a):               # 1 / ||a||  -- one EUP rsqrt push instead of sqrt + divide
    return lax.rsqrt(_vdot(a, a))


# ---------- the Pallas kernel ----------
def _geometric_controller_kernel(scal_ref, st_ref, rf_ref, out_ref):
    # scal_ref: SMEM (16,) f32 = [kp, kv, kori, kw, mass, g, 1/m, J row-major (9)]
    # st_ref:   VMEM (13, sub_tile, 128) f32 -- state, one controller per (sublane, lane)
    # rf_ref:   VMEM (24, sub_tile, 128) f32 -- reference trajectory
    # out_ref:  VMEM (4,  sub_tile, 128) f32 -- [thrust, Mx, My, Mz]
    kp, kv, kori, kw = scal_ref[0], scal_ref[1], scal_ref[2], scal_ref[3]
    m, g, inv_m = scal_ref[4], scal_ref[5], scal_ref[6]
    J = [scal_ref[7 + i] for i in range(9)]

    def srow(i):
        return st_ref[i]        # full (sub_tile, 128) slab

    def rrow(i):
        return rf_ref[i]

    def svec3(s):
        return (srow(s), srow(s + 1), srow(s + 2))

    def rvec3(s):
        return (rrow(s), rrow(s + 1), rrow(s + 2))

    pos = svec3(0)
    qx, qy, qz, qw = srow(3), srow(4), srow(5), srow(6)
    vel = svec3(7)
    w = svec3(10)

    des_pos = rvec3(0)
    des_vel = rvec3(3)
    des_acc = rvec3(6)
    des_acc_dot = rvec3(9)
    des_acc_ddot = rvec3(12)
    des_b1 = rvec3(15)
    des_b1_dot = rvec3(18)
    des_b1_ddot = rvec3(21)

    # hoisted quaternion products shared across the three rotation columns
    qxx, qyy, qzz = qx * qx, qy * qy, qz * qz
    qxy, qxz, qyz = qx * qy, qx * qz, qy * qz
    qwx, qwy, qwz = qw * qx, qw * qy, qw * qz

    # unit quaternion (x, y, z, w) -> rotation matrix, held as its three columns
    R_c0 = (1.0 - 2.0 * (qyy + qzz), 2.0 * (qxy + qwz), 2.0 * (qxz - qwy))
    R_c1 = (2.0 * (qxy - qwz), 1.0 - 2.0 * (qxx + qzz), 2.0 * (qyz + qwx))
    R_c2 = (2.0 * (qxz + qwy), 2.0 * (qyz - qwx), 1.0 - 2.0 * (qxx + qyy))

    def RT_mv(v):            # R.T @ v
        return (_vdot(R_c0, v), _vdot(R_c1, v), _vdot(R_c2, v))

    def J_mv(v):             # J @ v  (SMEM scalars broadcast across lanes)
        return (J[0] * v[0] + J[1] * v[1] + J[2] * v[2],
                J[3] * v[0] + J[4] * v[1] + J[5] * v[2],
                J[6] * v[0] + J[7] * v[1] + J[8] * v[2])

    # --- translational part (position PID with ki = 0) -----------------------
    err_p = _vsub(pos, des_pos)
    err_v = _vsub(vel, des_vel)
    pid_pos = _vadd(_vscale(kp, err_p), _vscale(kv, err_v))
    des_b3 = (-pid_pos[0] + m * des_acc[0],
              -pid_pos[1] + m * des_acc[1],
              -pid_pos[2] + m * (des_acc[2] - g))

    b3 = R_c2                                          # R @ e3
    thrust_des = -_vdot(des_b3, b3)
    t_over_m = thrust_des * inv_m                      # hoisted, reused 3x

    err_vel_dot = (-t_over_m * b3[0] - des_acc[0],
                   -t_over_m * b3[1] - des_acc[1],
                   g - t_over_m * b3[2] - des_acc[2])
    des_b3_dot = tuple(-kp * err_v[i] - kv * err_vel_dot[i] + m * des_acc_dot[i]
                       for i in range(3))

    # b3_dot = R @ skew(w) @ e3 = R @ (w x e3) = w1 * R_c0 - w0 * R_c1
    b3_dot = _vsub(_vscale(w[1], R_c0), _vscale(w[0], R_c1))
    thrust_dot = -_vdot(des_b3_dot, b3) - _vdot(des_b3, b3_dot)
    td_over_m = thrust_dot * inv_m

    err_vel_ddot = tuple(-td_over_m * b3[i] - t_over_m * b3_dot[i] - des_acc_dot[i]
                         for i in range(3))
    des_b3_ddot = tuple(-kp * err_vel_dot[i] - kv * err_vel_ddot[i]
                        + m * des_acc_ddot[i] for i in range(3))

    # --- desired frame construction (bug-for-bug with the reference code) ----
    des_b3 = _vscale(-_rnorm(des_b3), des_b3)
    des_b3_dot = _vscale(-_rnorm(des_b3_dot), des_b3_dot)
    des_b3_ddot = _vscale(-_rnorm(des_b3_ddot), des_b3_ddot)

    des_b2 = _vcross(des_b3, des_b1)
    des_b2_dot = _vadd(_vcross(des_b3_dot, des_b1), _vcross(des_b3, des_b1_dot))
    des_b2_ddot = _vadd(_vcross(des_b3_ddot, des_b1),
                        _vscale(2.0, _vcross(des_b3_dot, des_b1_dot)),
                        _vcross(des_b3, des_b1_ddot))

    r_b2 = _rnorm(des_b2)
    r_b2_dot = _rnorm(des_b2_dot)
    r_b2_ddot = _rnorm(des_b2_ddot)
    des_b2 = _vscale(r_b2, des_b2)
    des_b2_dot = _vscale(r_b2_dot, des_b2)      # numerator is des_b2 (as in reference)
    des_b2_ddot = _vscale(r_b2_ddot, des_b2)    # numerator is des_b2 (as in reference)

    des_b1 = _vcross(des_b2, des_b3)
    # NOTE: the reference also forms des_b1_dot / des_b1_ddot, but skew2vec only ever
    # reads columns 1 and 2 of des_R_dot / des_R_ddot, so those columns are dead code
    # for the outputs and are omitted here.

    des_b2 = _vscale(_rnorm(des_b2), des_b2)    # re-normalize (matches reference order)

    # des_R = [des_b1 | des_b2 | des_b3] (columns). Only the matrix elements that
    # skew2vec reads, i.e. (-A[1,2], A[0,2], -A[0,1]), are formed.
    dav = (-_vdot(des_b2, des_b3_dot),
           _vdot(des_b1, des_b3_dot),
           -_vdot(des_b1, des_b2_dot))

    # off-diagonal of skew(dav) @ skew(dav) is dav_i * dav_j
    daa = (-(_vdot(des_b2, des_b3_ddot) - dav[1] * dav[2]),
           (_vdot(des_b1, des_b3_ddot) - dav[0] * dav[2]),
           -(_vdot(des_b1, des_b2_ddot) - dav[0] * dav[1]))

    # compute_pose_error(R, des_R) = 0.5 * skew2vec(des_R.T @ R - R.T @ des_R)
    E12 = _vdot(des_b2, R_c2) - _vdot(R_c1, des_b3)
    E02 = _vdot(des_b1, R_c2) - _vdot(R_c0, des_b3)
    E01 = _vdot(des_b1, R_c1) - _vdot(R_c0, des_b2)
    pose_err = (-0.5 * E12, 0.5 * E02, -0.5 * E01)

    des_R_dav = _vadd(_vscale(dav[0], des_b1), _vscale(dav[1], des_b2),
                      _vscale(dav[2], des_b3))
    des_R_daa = _vadd(_vscale(daa[0], des_b1), _vscale(daa[1], des_b2),
                      _vscale(daa[2], des_b3))
    RT_dav = RT_mv(des_R_dav)
    RT_daa = RT_mv(des_R_daa)

    err_w = _vsub(w, RT_dav)                    # attitude PID (ki = 0)
    Jw = J_mv(w)
    M = _vadd(_vneg(_vadd(_vscale(kori, pose_err), _vscale(kw, err_w))),
              _vcross(w, Jw))
    temp_M = _vcross(w, _vsub(RT_dav, RT_daa))  # skew(w) @ (...)
    M = _vsub(M, J_mv(temp_M))

    # direct full-slab row stores -- no concatenate / sublane shuffle / masked store
    out_ref[0, :, :] = jnp.maximum(thrust_des, 0.0)
    out_ref[1, :, :] = M[0]
    out_ref[2, :, :] = M[1]
    out_ref[3, :, :] = M[2]


def _choose_sub_tile(sub_total):
    """sub_total: number of 128-controller sublane rows (a multiple of 8).

    Pick the largest sublane tile (multiple of 8, dividing sub_total, capped for VMEM)
    that still leaves >= 2 grid steps so v7x's two TensorCores both get work; with a
    single tile's worth of data we just use one step (fewest-steps wins on v5e/v6e)."""
    if sub_total <= 8:
        return sub_total
    best = 8
    for t in range(8, min(sub_total, _MAX_SUB_TILE) + 1, 8):
        if sub_total % t == 0 and sub_total // t >= 2:
            best = t
    return best


# ---------- wrappers ----------
@jax.jit
def geometric_controller_soa(state_fm, ref_fm, J, params, mass, g):
    """Batched controller, feature-major (SoA) layout -- the fast path.

    state_fm: (13, B) rows = [pos(3), quat xyzw(4), vel(3), angular_vel(3)]
    ref_fm:   (24, B) rows = [pos, vel, acc, acc_dot, acc_ddot, b1, b1_dot, b1_ddot]
    J: (3,3), params: (4,) = [kp, kv, kori, kw], mass/g scalars.
    Returns (4, B) = [thrust, Mx, My, Mz] per controller.
    """
    state_fm = jnp.asarray(state_fm, jnp.float32)
    ref_fm = jnp.asarray(ref_fm, jnp.float32)
    B = state_fm.shape[1]

    # pad the batch (lane axis) up to a multiple of 8*128 so blocks satisfy (8,128) tiling
    sub_total = max(8, ((pl.cdiv(B, _LANES) + 7) // 8) * 8)
    Bp = sub_total * _LANES
    if Bp != B:
        state_fm = jnp.pad(state_fm, ((0, 0), (0, Bp - B)))
        ref_fm = jnp.pad(ref_fm, ((0, 0), (0, Bp - B)))

    st = state_fm.reshape(13, sub_total, _LANES)     # free reshape (contiguous)
    rf = ref_fm.reshape(24, sub_total, _LANES)

    sub_tile = _choose_sub_tile(sub_total)
    grid = (sub_total // sub_tile,)

    mass_f = jnp.asarray(mass, jnp.float32).reshape(1)
    scal = jnp.concatenate([
        jnp.asarray(params, jnp.float32).reshape(4),
        mass_f,
        jnp.asarray(g, jnp.float32).reshape(1),
        1.0 / mass_f,
        jnp.asarray(J, jnp.float32).reshape(9),
    ])                                               # (16,)

    out = pl.pallas_call(
        _geometric_controller_kernel,
        out_shape=jax.ShapeDtypeStruct((_NOUT, sub_total, _LANES), jnp.float32),
        grid=grid,
        in_specs=[
            pl.BlockSpec(memory_space=pltpu.MemorySpace.SMEM),                # scalars
            pl.BlockSpec((13, sub_tile, _LANES), lambda b: (0, b, 0)),        # state
            pl.BlockSpec((24, sub_tile, _LANES), lambda b: (0, b, 0)),        # reference
        ],
        out_specs=pl.BlockSpec((_NOUT, sub_tile, _LANES), lambda b: (0, b, 0)),
        compiler_params=pltpu.CompilerParams(dimension_semantics=("parallel",)),
        cost_estimate=pl.CostEstimate(
            flops=650 * Bp,                  # ~650 VPU ops / controller
            transcendentals=7 * Bp,          # 7 rsqrt / controller
            bytes_accessed=(13 + 24 + _NOUT) * 4 * Bp + 16 * 4),
    )(scal, st, rf)

    # padded lanes hold rsqrt(0)=inf/NaN garbage; slice them off
    return out.reshape(_NOUT, Bp)[:, :B]


def geometric_controller(state, ref_state, J, params, mass, g):
    """Batch-major compatibility wrapper: state (B,13), ref_state (B,24) -> (B,4).

    NOTE: incurs two layout transposes; keep controller state in feature-major (SoA)
    layout upstream and call geometric_controller_soa directly on the hot path."""
    out_fm = geometric_controller_soa(jnp.asarray(state, jnp.float32).T,
                                      jnp.asarray(ref_state, jnp.float32).T,
                                      J, params, mass, g)
    return out_fm.T


# ---------- pure-numpy reference (mirrors the PyTorch module, one controller) ----------
def _ref_forward(state, ref, J, params, mass, g):
    state = np.asarray(state, np.float64)
    ref = np.asarray(ref, np.float64)
    J = np.asarray(J, np.float64)
    kp, kv, kori, kw = [float(p) for p in np.asarray(params)]
    m, g = float(mass), float(g)
    e3 = np.array([0.0, 0.0, 1.0]).reshape(3, 1)

    def skew(v):
        v = np.asarray(v).reshape(3)
        return np.array([[0.0, -v[2], v[1]], [v[2], 0.0, -v[0]], [-v[1], v[0], 0.0]])

    def skew2vec(S):
        return np.array([-S[1, 2], S[0, 2], -S[0, 1]]).reshape(3, 1)

    def quat2mat(q):
        x, y, z, w = q
        return np.array([
            [1 - 2 * (y * y + z * z), 2 * (x * y - w * z), 2 * (x * z + w * y)],
            [2 * (x * y + w * z), 1 - 2 * (x * x + z * z), 2 * (y * z - w * x)],
            [2 * (x * z - w * y), 2 * (y * z + w * x), 1 - 2 * (x * x + y * y)]])

    def col(a, s):
        return a[s:s + 3].reshape(3, 1)

    des_pos, des_vel, des_acc = col(ref, 0), col(ref, 3), col(ref, 6)
    des_acc_dot, des_acc_ddot = col(ref, 9), col(ref, 12)
    des_b1, des_b1_dot, des_b1_ddot = col(ref, 15), col(ref, 18), col(ref, 21)
    pos, quat, vel, w = col(state, 0), state[3:7], col(state, 7), col(state, 10)
    R = quat2mat(quat)

    cr = lambda a, b: np.cross(a, b, axis=0)
    des_b3 = -(kp * (pos - des_pos) + kv * (vel - des_vel)) - m * g * e3 + m * des_acc
    b3 = R @ e3
    thrust_des = float((-(des_b3.T @ b3)).item())
    err_vel_dot = g * e3 - thrust_des / m * b3 - des_acc
    des_b3_dot = -kp * (vel - des_vel) - kv * err_vel_dot + m * des_acc_dot
    b3_dot = R @ skew(w) @ e3
    thrust_dot = float((-des_b3_dot.T @ b3 - des_b3.T @ b3_dot).item())
    err_vel_ddot = (-thrust_dot * b3 - thrust_des * b3_dot) / m - des_acc_dot
    des_b3_ddot = -kp * err_vel_dot - kv * err_vel_ddot + m * des_acc_ddot
    des_b3 = -des_b3 / np.linalg.norm(des_b3)
    des_b3_dot = -des_b3_dot / np.linalg.norm(des_b3_dot)
    des_b3_ddot = -des_b3_ddot / np.linalg.norm(des_b3_ddot)
    des_b2 = cr(des_b3, des_b1)
    des_b2_dot = cr(des_b3_dot, des_b1) + cr(des_b3, des_b1_dot)
    des_b2_ddot = cr(des_b3_ddot, des_b1) + 2 * cr(des_b3_dot, des_b1_dot) + cr(des_b3, des_b1_ddot)
    des_b2 = des_b2 / np.linalg.norm(des_b2)
    des_b2_dot = des_b2 / np.linalg.norm(des_b2_dot)
    des_b2_ddot = des_b2 / np.linalg.norm(des_b2_ddot)
    des_b1n = cr(des_b2, des_b3)
    des_b1_dotn = cr(des_b2_dot, des_b3) + cr(des_b2, des_b3_dot)
    des_b1_ddotn = cr(des_b2_ddot, des_b3) + 2 * cr(des_b2_dot, des_b3_dot) + cr(des_b2, des_b3_ddot)
    des_b2 = des_b2 / np.linalg.norm(des_b2)
    des_b1_dot = des_b2 / np.linalg.norm(des_b1_dotn)
    des_b1_ddot = des_b2 / np.linalg.norm(des_b1_ddotn)
    des_b1 = des_b1n
    des_R = np.concatenate([des_b1, des_b2, des_b3], axis=1)
    des_R_dot = np.concatenate([des_b1_dot, des_b2_dot, des_b3_dot], axis=1)
    des_R_ddot = np.concatenate([des_b1_ddot, des_b2_ddot, des_b3_ddot], axis=1)
    dav = skew2vec(des_R.T @ des_R_dot)
    W = skew(dav)
    daa = skew2vec(des_R.T @ des_R_ddot - W @ W)
    pose_err = 0.5 * skew2vec(des_R.T @ R - R.T @ des_R)
    err_w = w - R.T @ (des_R @ dav)
    M = -(kori * pose_err + kw * err_w) + cr(w, J @ w)
    temp_M = skew(w) @ (R.T @ des_R @ dav - R.T @ des_R @ daa)
    M = (M - J @ temp_M).reshape(-1)
    return np.concatenate([[max(0.0, thrust_des)], M])


if __name__ == "__main__":
    key = jax.random.PRNGKey(0)
    kpos, kquat, kvel, kref, kb1 = jax.random.split(key, 5)

    # B pads to 2048 controllers -> 2 grid steps of (feat, 8, 128); exercises both the
    # grid loop and lane padding.
    B = 1200

    pos = jax.random.normal(kpos, (B, 3))
    quat = jax.random.normal(kquat, (B, 4))
    quat = quat / jnp.linalg.norm(quat, axis=1, keepdims=True)   # unit quats (as SO3 expects)
    velw = 0.3 * jax.random.normal(kvel, (B, 6))
    state = jnp.concatenate([pos, quat, velw], axis=1).astype(jnp.float32)      # (B, 13)

    ref_state = 0.3 * jax.random.normal(kref, (B, 24))
    # well-conditioned heading vector + small heading derivatives
    b1 = jnp.array([1.0, 0.1, 0.0]) + 0.1 * jax.random.normal(kb1, (B, 3))
    ref_state = ref_state.at[:, 15:18].set(b1)
    ref_state = ref_state.at[:, 18:24].set(0.1 * ref_state[:, 18:24])
    ref_state = ref_state.astype(jnp.float32)                                   # (B, 24)

    J = jnp.array([[0.02, 0.0, 0.0],
                   [0.0, 0.025, 0.0],
                   [0.0, 0.0, 0.03]], jnp.float32)
    params = jnp.array([4.0, 3.0, 2.0, 0.5], jnp.float32)    # kp, kv, kori, kw
    mass, g = 1.2, 9.81

    # One-time data prep: keep controller state in feature-major (SoA) layout upstream
    # so the hot path has no per-call (B,37)->(37,B) transpose.
    state_fm = jnp.asarray(state.T)   # (13, B)
    ref_fm = jnp.asarray(ref_state.T)  # (24, B)

    out_fm = geometric_controller_soa(state_fm, ref_fm, J, params, mass, g)
    out_fm = jax.block_until_ready(out_fm)
    out = np.asarray(out_fm).T                                                   # (B, 4)
    assert out.shape == (B, 4)

    state_np = np.asarray(state)
    ref_np = np.asarray(ref_state)
    ref_out = np.stack([_ref_forward(state_np[i], ref_np[i], np.asarray(J),
                                     np.asarray(params), mass, g) for i in range(B)])

    np.testing.assert_allclose(out.astype(np.float64), ref_out, rtol=2e-2, atol=5e-3)
    print("KERNEL_OK")
</pallas_src>

<mosaic_0001>
module attributes {stable_mosaic.version = 11 : i64} {
  func.func @_geometric_controller_kernel(%arg0: i32, %arg1: memref<16xf32, #tpu.memory_space<smem>>, %arg2: memref<13x8x128xf32, #tpu.memory_space<vmem>>, %arg3: memref<24x8x128xf32, #tpu.memory_space<vmem>>, %arg4: memref<4x8x128xf32, #tpu.memory_space<vmem>>) attributes {dimension_semantics = [#tpu.dimension_semantics<parallel>], iteration_bounds = array<i64: 2>, scalar_prefetch = 0 : i64, scratch_operands = 0 : i64, tpu.core_type = #tpu.core_type<tc>, window_params = [{transform_indices = @transform_0, window_bounds = array<i64: 16>}, {transform_indices = @transform_1, window_bounds = array<i64: 13, 8, 128>}, {transform_indices = @transform_2, window_bounds = array<i64: 24, 8, 128>}, {transform_indices = @transform_3, window_bounds = array<i64: 4, 8, 128>}]} {
    %c0 = arith.constant 0 : index
    %0 = memref.load %arg1[%c0] : memref<16xf32, #tpu.memory_space<smem>>
    %c1 = arith.constant 1 : index
    %1 = memref.load %arg1[%c1] : memref<16xf32, #tpu.memory_space<smem>>
    %c2 = arith.constant 2 : index
    %2 = memref.load %arg1[%c2] : memref<16xf32, #tpu.memory_space<smem>>
    %c3 = arith.constant 3 : index
    %3 = memref.load %arg1[%c3] : memref<16xf32, #tpu.memory_space<smem>>
    %c4 = arith.constant 4 : index
    %4 = memref.load %arg1[%c4] : memref<16xf32, #tpu.memory_space<smem>>
    %c5 = arith.constant 5 : index
    %5 = memref.load %arg1[%c5] : memref<16xf32, #tpu.memory_space<smem>>
    %c6 = arith.constant 6 : index
    %6 = memref.load %arg1[%c6] : memref<16xf32, #tpu.memory_space<smem>>
    %c7 = arith.constant 7 : index
    %7 = memref.load %arg1[%c7] : memref<16xf32, #tpu.memory_space<smem>>
    %c8 = arith.constant 8 : index
    %8 = memref.load %arg1[%c8] : memref<16xf32, #tpu.memory_space<smem>>
    %c9 = arith.constant 9 : index
    %9 = memref.load %arg1[%c9] : memref<16xf32, #tpu.memory_space<smem>>
    %c10 = arith.constant 10 : index
    %10 = memref.load %arg1[%c10] : memref<16xf32, #tpu.memory_space<smem>>
    %c11 = arith.constant 11 : index
    %11 = memref.load %arg1[%c11] : memref<16xf32, #tpu.memory_space<smem>>
    %c12 = arith.constant 12 : index
    %12 = memref.load %arg1[%c12] : memref<16xf32, #tpu.memory_space<smem>>
    %c13 = arith.constant 13 : index
    %13 = memref.load %arg1[%c13] : memref<16xf32, #tpu.memory_space<smem>>
    %c14 = arith.constant 14 : index
    %14 = memref.load %arg1[%c14] : memref<16xf32, #tpu.memory_space<smem>>
    %c15 = arith.constant 15 : index
    %15 = memref.load %arg1[%c15] : memref<16xf32, #tpu.memory_space<smem>>
    %c0_0 = arith.constant 0 : index
    %c0_1 = arith.constant 0 : index
    %c0_2 = arith.constant 0 : index
    %16 = vector.load %arg2[%c0_0, %c0_1, %c0_2] : memref<13x8x128xf32, #tpu.memory_space<vmem>>, vector<1x8x128xf32>
    %17 = vector.shape_cast %16 : vector<1x8x128xf32> to vector<8x128xf32>
    %c1_3 = arith.constant 1 : index
    %c0_4 = arith.constant 0 : index
    %c0_5 = arith.constant 0 : index
    %18 = vector.load %arg2[%c1_3, %c0_4, %c0_5] : memref<13x8x128xf32, #tpu.memory_space<vmem>>, vector<1x8x128xf32>
    %19 = vector.shape_cast %18 : vector<1x8x128xf32> to vector<8x128xf32>
    %c2_6 = arith.constant 2 : index
    %c0_7 = arith.constant 0 : index
    %c0_8 = arith.constant 0 : index
    %20 = vector.load %arg2[%c2_6, %c0_7, %c0_8] : memref<13x8x128xf32, #tpu.memory_space<vmem>>, vector<1x8x128xf32>
    %21 = vector.shape_cast %20 : vector<1x8x128xf32> to vector<8x128xf32>
    %c3_9 = arith.constant 3 : index
    %c0_10 = arith.constant 0 : index
    %c0_11 = arith.constant 0 : index
    %22 = vector.load %arg2[%c3_9, %c0_10, %c0_11] : memref<13x8x128xf32, #tpu.memory_space<vmem>>, vector<1x8x128xf32>
    %23 = vector.shape_cast %22 : vector<1x8x128xf32> to vector<8x128xf32>
    %c4_12 = arith.constant 4 : index
    %c0_13 = arith.constant 0 : index
    %c0_14 = arith.constant 0 : index
    %24 = vector.load %arg2[%c4_12, %c0_13, %c0_14] : memref<13x8x128xf32, #tpu.memory_space<vmem>>, vector<1x8x128xf32>
    %25 = vector.shape_cast %24 : vector<1x8x128xf32> to vector<8x128xf32>
    %c5_15 = arith.constant 5 : index
    %c0_16 = arith.constant 0 : index
    %c0_17 = arith.constant 0 : index
    %26 = vector.load %arg2[%c5_15, %c0_16, %c0_17] : memref<13x8x128xf32, #tpu.memory_space<vmem>>, vector<1x8x128xf32>
    %27 = vector.shape_cast %26 : vector<1x8x128xf32> to vector<8x128xf32>
    %c6_18 = arith.constant 6 : index
    %c0_19 = arith.constant 0 : index
    %c0_20 = arith.constant 0 : index
    %28 = vector.load %arg2[%c6_18, %c0_19, %c0_20] : memref<13x8x128xf32, #tpu.memory_space<vmem>>, vector<1x8x128xf32>
    %29 = vector.shape_cast %28 : vector<1x8x128xf32> to vector<8x128xf32>
    %c7_21 = arith.constant 7 : index
    %c0_22 = arith.constant 0 : index
    %c0_23 = arith.constant 0 : index
    %30 = vector.load %arg2[%c7_21, %c0_22, %c0_23] : memref<13x8x128xf32, #tpu.memory_space<vmem>>, vector<1x8x128xf32>
    %31 = vector.shape_cast %30 : vector<1x8x128xf32> to vector<8x128xf32>
    %c8_24 = arith.constant 8 : index
    %c0_25 = arith.constant 0 : index
    %c0_26 = arith.constant 0 : index
    %32 = vector.load %arg2[%c8_24, %c0_25, %c0_26] : memref<13x8x128xf32, #tpu.memory_space<vmem>>, vector<1x8x128xf32>
    %33 = vector.shape_cast %32 : vector<1x8x128xf32> to vector<8x128xf32>
    %c9_27 = arith.constant 9 : index
    %c0_28 = arith.constant 0 : index
    %c0_29 = arith.constant 0 : index
    %34 = vector.load %arg2[%c9_27, %c0_28, %c0_29] : memref<13x8x128xf32, #tpu.memory_space<vmem>>, vector<1x8x128xf32>
    %35 = vector.shape_cast %34 : vector<1x8x128xf32> to vector<8x128xf32>
    %c10_30 = arith.constant 10 : index
    %c0_31 = arith.constant 0 : index
    %c0_32 = arith.constant 0 : index
    %36 = vector.load %arg2[%c10_30, %c0_31, %c0_32] : memref<13x8x128xf32, #tpu.memory_space<vmem>>, vector<1x8x128xf32>
    %37 = vector.shape_cast %36 : vector<1x8x128xf32> to vector<8x128xf32>
    %c11_33 = arith.constant 11 : index
    %c0_34 = arith.constant 0 : index
    %c0_35 = arith.constant 0 : index
    %38 = vector.load %arg2[%c11_33, %c0_34, %c0_35] : memref<13x8x128xf32, #tpu.memory_space<vmem>>, vector<1x8x128xf32>
    %39 = vector.shape_cast %38 : vector<1x8x128xf32> to vector<8x128xf32>
    %c12_36 = arith.constant 12 : index
    %c0_37 = arith.constant 0 : index
    %c0_38 = arith.constant 0 : index
    %40 = vector.load %arg2[%c12_36, %c0_37, %c0_38] : memref<13x8x128xf32, #tpu.memory_space<vmem>>, vector<1x8x128xf32>
    %41 = vector.shape_cast %40 : vector<1x8x128xf32> to vector<8x128xf32>
    %c0_39 = arith.constant 0 : index
    %c0_40 = arith.constant 0 : index
    %c0_41 = arith.constant 0 : index
    %42 = vector.load %arg3[%c0_39, %c0_40, %c0_41] : memref<24x8x128xf32, #tpu.memory_space<vmem>>, vector<1x8x128xf32>
    %43 = vector.shape_cast %42 : vector<1x8x128xf32> to vector<8x128xf32>
    %c1_42 = arith.constant 1 : index
    %c0_43 = arith.constant 0 : index
    %c0_44 = arith.constant 0 : index
    %44 = vector.load %arg3[%c1_42, %c0_43, %c0_44] : memref<24x8x128xf32, #tpu.memory_space<vmem>>, vector<1x8x128xf32>
    %45 = vector.shape_cast %44 : vector<1x8x128xf32> to vector<8x128xf32>
    %c2_45 = arith.constant 2 : index
    %c0_46 = arith.constant 0 : index
    %c0_47 = arith.constant 0 : index
    %46 = vector.load %arg3[%c2_45, %c0_46, %c0_47] : memref<24x8x128xf32, #tpu.memory_space<vmem>>, vector<1x8x128xf32>
    %47 = vector.shape_cast %46 : vector<1x8x128xf32> to vector<8x128xf32>
    %c3_48 = arith.constant 3 : index
    %c0_49 = arith.constant 0 : index
    %c0_50 = arith.constant 0 : index
    %48 = vector.load %arg3[%c3_48, %c0_49, %c0_50] : memref<24x8x128xf32, #tpu.memory_space<vmem>>, vector<1x8x128xf32>
    %49 = vector.shape_cast %48 : vector<1x8x128xf32> to vector<8x128xf32>
    %c4_51 = arith.constant 4 : index
    %c0_52 = arith.constant 0 : index
    %c0_53 = arith.constant 0 : index
    %50 = vector.load %arg3[%c4_51, %c0_52, %c0_53] : memref<24x8x128xf32, #tpu.memory_space<vmem>>, vector<1x8x128xf32>
    %51 = vector.shape_cast %50 : vector<1x8x128xf32> to vector<8x128xf32>
    %c5_54 = arith.constant 5 : index
    %c0_55 = arith.constant 0 : index
    %c0_56 = arith.constant 0 : index
    %52 = vector.load %arg3[%c5_54, %c0_55, %c0_56] : memref<24x8x128xf32, #tpu.memory_space<vmem>>, vector<1x8x128xf32>
    %53 = vector.shape_cast %52 : vector<1x8x128xf32> to vector<8x128xf32>
    %c6_57 = arith.constant 6 : index
    %c0_58 = arith.constant 0 : index
    %c0_59 = arith.constant 0 : index
    %54 = vector.load %arg3[%c6_57, %c0_58, %c0_59] : memref<24x8x128xf32, #tpu.memory_space<vmem>>, vector<1x8x128xf32>
    %55 = vector.shape_cast %54 : vector<1x8x128xf32> to vector<8x128xf32>
    %c7_60 = arith.constant 7 : index
    %c0_61 = arith.constant 0 : index
    %c0_62 = arith.constant 0 : index
    %56 = vector.load %arg3[%c7_60, %c0_61, %c0_62] : memref<24x8x128xf32, #tpu.memory_space<vmem>>, vector<1x8x128xf32>
    %57 = vector.shape_cast %56 : vector<1x8x128xf32> to vector<8x128xf32>
    %c8_63 = arith.constant 8 : index
    %c0_64 = arith.constant 0 : index
    %c0_65 = arith.constant 0 : index
    %58 = vector.load %arg3[%c8_63, %c0_64, %c0_65] : memref<24x8x128xf32, #tpu.memory_space<vmem>>, vector<1x8x128xf32>
    %59 = vector.shape_cast %58 : vector<1x8x128xf32> to vector<8x128xf32>
    %c9_66 = arith.constant 9 : index
    %c0_67 = arith.constant 0 : index
    %c0_68 = arith.constant 0 : index
    %60 = vector.load %arg3[%c9_66, %c0_67, %c0_68] : memref<24x8x128xf32, #tpu.memory_space<vmem>>, vector<1x8x128xf32>
    %61 = vector.shape_cast %60 : vector<1x8x128xf32> to vector<8x128xf32>
    %c10_69 = arith.constant 10 : index
    %c0_70 = arith.constant 0 : index
    %c0_71 = arith.constant 0 : index
    %62 = vector.load %arg3[%c10_69, %c0_70, %c0_71] : memref<24x8x128xf32, #tpu.memory_space<vmem>>, vector<1x8x128xf32>
    %63 = vector.shape_cast %62 : vector<1x8x128xf32> to vector<8x128xf32>
    %c11_72 = arith.constant 11 : index
    %c0_73 = arith.constant 0 : index
    %c0_74 = arith.constant 0 : index
    %64 = vector.load %arg3[%c11_72, %c0_73, %c0_74] : memref<24x8x128xf32, #tpu.memory_space<vmem>>, vector<1x8x128xf32>
    %65 = vector.shape_cast %64 : vector<1x8x128xf32> to vector<8x128xf32>
    %c12_75 = arith.constant 12 : index
    %c0_76 = arith.constant 0 : index
    %c0_77 = arith.constant 0 : index
    %66 = vector.load %arg3[%c12_75, %c0_76, %c0_77] : memref<24x8x128xf32, #tpu.memory_space<vmem>>, vector<1x8x128xf32>
    %67 = vector.shape_cast %66 : vector<1x8x128xf32> to vector<8x128xf32>
    %c13_78 = arith.constant 13 : index
    %c0_79 = arith.constant 0 : index
    %c0_80 = arith.constant 0 : index
    %68 = vector.load %arg3[%c13_78, %c0_79, %c0_80] : memref<24x8x128xf32, #tpu.memory_space<vmem>>, vector<1x8x128xf32>
    %69 = vector.shape_cast %68 : vector<1x8x128xf32> to vector<8x128xf32>
    %c14_81 = arith.constant 14 : index
    %c0_82 = arith.constant 0 : index
    %c0_83 = arith.constant 0 : index
    %70 = vector.load %arg3[%c14_81, %c0_82, %c0_83] : memref<24x8x128xf32, #tpu.memory_space<vmem>>, vector<1x8x128xf32>
    %71 = vector.shape_cast %70 : vector<1x8x128xf32> to vector<8x128xf32>
    %c15_84 = arith.constant 15 : index
    %c0_85 = arith.constant 0 : index
    %c0_86 = arith.constant 0 : index
    %72 = vector.load %arg3[%c15_84, %c0_85, %c0_86] : memref<24x8x128xf32, #tpu.memory_space<vmem>>, vector<1x8x128xf32>
    %73 = vector.shape_cast %72 : vector<1x8x128xf32> to vector<8x128xf32>
    %c16 = arith.constant 16 : index
    %c0_87 = arith.constant 0 : index
    %c0_88 = arith.constant 0 : index
    %74 = vector.load %arg3[%c16, %c0_87, %c0_88] : memref<24x8x128xf32, #tpu.memory_space<vmem>>, vector<1x8x128xf32>
    %75 = vector.shape_cast %74 : vector<1x8x128xf32> to vector<8x128xf32>
    %c17 = arith.constant 17 : index
    %c0_89 = arith.constant 0 : index
    %c0_90 = arith.constant 0 : index
    %76 = vector.load %arg3[%c17, %c0_89, %c0_90] : memref<24x8x128xf32, #tpu.memory_space<vmem>>, vector<1x8x128xf32>
    %77 = vector.shape_cast %76 : vector<1x8x128xf32> to vector<8x128xf32>
    %c18 = arith.constant 18 : index
    %c0_91 = arith.constant 0 : index
    %c0_92 = arith.constant 0 : index
    %78 = vector.load %arg3[%c18, %c0_91, %c0_92] : memref<24x8x128xf32, #tpu.memory_space<vmem>>, vector<1x8x128xf32>
    %79 = vector.shape_cast %78 : vector<1x8x128xf32> to vector<8x128xf32>
    %c19 = arith.constant 19 : index
    %c0_93 = arith.constant 0 : index
    %c0_94 = arith.constant 0 : index
    %80 = vector.load %arg3[%c19, %c0_93, %c0_94] : memref<24x8x128xf32, #tpu.memory_space<vmem>>, vector<1x8x128xf32>
    %81 = vector.shape_cast %80 : vector<1x8x128xf32> to vector<8x128xf32>
    %c20 = arith.constant 20 : index
    %c0_95 = arith.constant 0 : index
    %c0_96 = arith.constant 0 : index
    %82 = vector.load %arg3[%c20, %c0_95, %c0_96] : memref<24x8x128xf32, #tpu.memory_space<vmem>>, vector<1x8x128xf32>
    %83 = vector.shape_cast %82 : vector<1x8x128xf32> to vector<8x128xf32>
    %c21 = arith.constant 21 : index
    %c0_97 = arith.constant 0 : index
    %c0_98 = arith.constant 0 : index
    %84 = vector.load %arg3[%c21, %c0_97, %c0_98] : memref<24x8x128xf32, #tpu.memory_space<vmem>>, vector<1x8x128xf32>
    %85 = vector.shape_cast %84 : vector<1x8x128xf32> to vector<8x128xf32>
    %c22 = arith.constant 22 : index
    %c0_99 = arith.constant 0 : index
    %c0_100 = arith.constant 0 : index
    %86 = vector.load %arg3[%c22, %c0_99, %c0_100] : memref<24x8x128xf32, #tpu.memory_space<vmem>>, vector<1x8x128xf32>
    %87 = vector.shape_cast %86 : vector<1x8x128xf32> to vector<8x128xf32>
    %c23 = arith.constant 23 : index
    %c0_101 = arith.constant 0 : index
    %c0_102 = arith.constant 0 : index
    %88 = vector.load %arg3[%c23, %c0_101, %c0_102] : memref<24x8x128xf32, #tpu.memory_space<vmem>>, vector<1x8x128xf32>
    %89 = vector.shape_cast %88 : vector<1x8x128xf32> to vector<8x128xf32>
    %90 = arith.mulf %23, %23 : vector<8x128xf32>
    %91 = arith.mulf %25, %25 : vector<8x128xf32>
    %92 = arith.mulf %27, %27 : vector<8x128xf32>
    %93 = arith.mulf %23, %25 : vector<8x128xf32>
    %94 = arith.mulf %23, %27 : vector<8x128xf32>
    %95 = arith.mulf %25, %27 : vector<8x128xf32>
    %96 = arith.mulf %29, %23 : vector<8x128xf32>
    %97 = arith.mulf %29, %25 : vector<8x128xf32>
    %98 = arith.mulf %29, %27 : vector<8x128xf32>
    %99 = arith.addf %91, %92 : vector<8x128xf32>
    %cst = arith.constant 2.000000e+00 : f32
    %100 = vector.broadcast %cst : f32 to vector<8x128xf32>
    %101 = arith.mulf %100, %99 : vector<8x128xf32>
    %cst_103 = arith.constant 1.000000e+00 : f32
    %102 = vector.broadcast %cst_103 : f32 to vector<8x128xf32>
    %103 = arith.subf %102, %101 : vector<8x128xf32>
    %104 = arith.addf %93, %98 : vector<8x128xf32>
    %cst_104 = arith.constant 2.000000e+00 : f32
    %105 = vector.broadcast %cst_104 : f32 to vector<8x128xf32>
    %106 = arith.mulf %105, %104 : vector<8x128xf32>
    %107 = arith.subf %94, %97 : vector<8x128xf32>
    %cst_105 = arith.constant 2.000000e+00 : f32
    %108 = vector.broadcast %cst_105 : f32 to vector<8x128xf32>
    %109 = arith.mulf %108, %107 : vector<8x128xf32>
    %110 = arith.subf %93, %98 : vector<8x128xf32>
    %cst_106 = arith.constant 2.000000e+00 : f32
    %111 = vector.broadcast %cst_106 : f32 to vector<8x128xf32>
    %112 = arith.mulf %111, %110 : vector<8x128xf32>
    %113 = arith.addf %90, %92 : vector<8x128xf32>
    %cst_107 = arith.constant 2.000000e+00 : f32
    %114 = vector.broadcast %cst_107 : f32 to vector<8x128xf32>
    %115 = arith.mulf %114, %113 : vector<8x128xf32>
    %cst_108 = arith.constant 1.000000e+00 : f32
    %116 = vector.broadcast %cst_108 : f32 to vector<8x128xf32>
    %117 = arith.subf %116, %115 : vector<8x128xf32>
    %118 = arith.addf %95, %96 : vector<8x128xf32>
    %cst_109 = arith.constant 2.000000e+00 : f32
    %119 = vector.broadcast %cst_109 : f32 to vector<8x128xf32>
    %120 = arith.mulf %119, %118 : vector<8x128xf32>
    %121 = arith.addf %94, %97 : vector<8x128xf32>
    %cst_110 = arith.constant 2.000000e+00 : f32
    %122 = vector.broadcast %cst_110 : f32 to vector<8x128xf32>
    %123 = arith.mulf %122, %121 : vector<8x128xf32>
    %124 = arith.subf %95, %96 : vector<8x128xf32>
    %cst_111 = arith.constant 2.000000e+00 : f32
    %125 = vector.broadcast %cst_111 : f32 to vector<8x128xf32>
    %126 = arith.mulf %125, %124 : vector<8x128xf32>
    %127 = arith.addf %90, %91 : vector<8x128xf32>
    %cst_112 = arith.constant 2.000000e+00 : f32
    %128 = vector.broadcast %cst_112 : f32 to vector<8x128xf32>
    %129 = arith.mulf %128, %127 : vector<8x128xf32>
    %cst_113 = arith.constant 1.000000e+00 : f32
    %130 = vector.broadcast %cst_113 : f32 to vector<8x128xf32>
    %131 = arith.subf %130, %129 : vector<8x128xf32>
    %132 = arith.subf %17, %43 : vector<8x128xf32>
    %133 = arith.subf %19, %45 : vector<8x128xf32>
    %134 = arith.subf %21, %47 : vector<8x128xf32>
    %135 = arith.subf %31, %49 : vector<8x128xf32>
    %136 = arith.subf %33, %51 : vector<8x128xf32>
    %137 = arith.subf %35, %53 : vector<8x128xf32>
    %138 = vector.broadcast %0 : f32 to vector<8x128xf32>
    %139 = arith.mulf %138, %132 : vector<8x128xf32>
    %140 = vector.broadcast %0 : f32 to vector<8x128xf32>
    %141 = arith.mulf %140, %133 : vector<8x128xf32>
    %142 = vector.broadcast %0 : f32 to vector<8x128xf32>
    %143 = arith.mulf %142, %134 : vector<8x128xf32>
    %144 = vector.broadcast %1 : f32 to vector<8x128xf32>
    %145 = arith.mulf %144, %135 : vector<8x128xf32>
    %146 = vector.broadcast %1 : f32 to vector<8x128xf32>
    %147 = arith.mulf %146, %136 : vector<8x128xf32>
    %148 = vector.broadcast %1 : f32 to vector<8x128xf32>
    %149 = arith.mulf %148, %137 : vector<8x128xf32>
    %cst_114 = arith.constant 0.000000e+00 : f32
    %150 = vector.broadcast %cst_114 : f32 to vector<8x128xf32>
    %151 = arith.addf %150, %139 : vector<8x128xf32>
    %152 = arith.addf %151, %145 : vector<8x128xf32>
    %cst_115 = arith.constant 0.000000e+00 : f32
    %153 = vector.broadcast %cst_115 : f32 to vector<8x128xf32>
    %154 = arith.addf %153, %141 : vector<8x128xf32>
    %155 = arith.addf %154, %147 : vector<8x128xf32>
    %cst_116 = arith.constant 0.000000e+00 : f32
    %156 = vector.broadcast %cst_116 : f32 to vector<8x128xf32>
    %157 = arith.addf %156, %143 : vector<8x128xf32>
    %158 = arith.addf %157, %149 : vector<8x128xf32>
    %cst_117 = arith.constant 0.000000e+00 : f32
    %159 = vector.broadcast %cst_117 : f32 to vector<8x128xf32>
    %160 = arith.subf %159, %152 : vector<8x128xf32>
    %161 = vector.broadcast %4 : f32 to vector<8x128xf32>
    %162 = arith.mulf %161, %55 : vector<8x128xf32>
    %163 = arith.addf %160, %162 : vector<8x128xf32>
    %cst_118 = arith.constant 0.000000e+00 : f32
    %164 = vector.broadcast %cst_118 : f32 to vector<8x128xf32>
    %165 = arith.subf %164, %155 : vector<8x128xf32>
    %166 = vector.broadcast %4 : f32 to vector<8x128xf32>
    %167 = arith.mulf %166, %57 : vector<8x128xf32>
    %168 = arith.addf %165, %167 : vector<8x128xf32>
    %cst_119 = arith.constant 0.000000e+00 : f32
    %169 = vector.broadcast %cst_119 : f32 to vector<8x128xf32>
    %170 = arith.subf %169, %158 : vector<8x128xf32>
    %171 = vector.broadcast %5 : f32 to vector<8x128xf32>
    %172 = arith.subf %59, %171 : vector<8x128xf32>
    %173 = vector.broadcast %4 : f32 to vector<8x128xf32>
    %174 = arith.mulf %173, %172 : vector<8x128xf32>
    %175 = arith.addf %170, %174 : vector<8x128xf32>
    %176 = arith.mulf %163, %123 : vector<8x128xf32>
    %177 = arith.mulf %168, %126 : vector<8x128xf32>
    %178 = arith.addf %176, %177 : vector<8x128xf32>
    %179 = arith.mulf %175, %131 : vector<8x128xf32>
    %180 = arith.addf %178, %179 : vector<8x128xf32>
    %cst_120 = arith.constant 0.000000e+00 : f32
    %181 = vector.broadcast %cst_120 : f32 to vector<8x128xf32>
    %182 = arith.subf %181, %180 : vector<8x128xf32>
    %183 = vector.broadcast %6 : f32 to vector<8x128xf32>
    %184 = arith.mulf %182, %183 : vector<8x128xf32>
    %cst_121 = arith.constant 0.000000e+00 : f32
    %185 = vector.broadcast %cst_121 : f32 to vector<8x128xf32>
    %186 = arith.subf %185, %184 : vector<8x128xf32>
    %187 = arith.mulf %186, %123 : vector<8x128xf32>
    %188 = arith.subf %187, %55 : vector<8x128xf32>
    %cst_122 = arith.constant 0.000000e+00 : f32
    %189 = vector.broadcast %cst_122 : f32 to vector<8x128xf32>
    %190 = arith.subf %189, %184 : vector<8x128xf32>
    %191 = arith.mulf %190, %126 : vector<8x128xf32>
    %192 = arith.subf %191, %57 : vector<8x128xf32>
    %193 = arith.mulf %184, %131 : vector<8x128xf32>
    %194 = vector.broadcast %5 : f32 to vector<8x128xf32>
    %195 = arith.subf %194, %193 : vector<8x128xf32>
    %196 = arith.subf %195, %59 : vector<8x128xf32>
    %cst_123 = arith.constant 0.000000e+00 : f32
    %197 = arith.subf %cst_123, %0 : f32
    %198 = vector.broadcast %197 : f32 to vector<8x128xf32>
    %199 = arith.mulf %198, %135 : vector<8x128xf32>
    %200 = vector.broadcast %1 : f32 to vector<8x128xf32>
    %201 = arith.mulf %200, %188 : vector<8x128xf32>
    %202 = arith.subf %199, %201 : vector<8x128xf32>
    %203 = vector.broadcast %4 : f32 to vector<8x128xf32>
    %204 = arith.mulf %203, %61 : vector<8x128xf32>
    %205 = arith.addf %202, %204 : vector<8x128xf32>
    %cst_124 = arith.constant 0.000000e+00 : f32
    %206 = arith.subf %cst_124, %0 : f32
    %207 = vector.broadcast %206 : f32 to vector<8x128xf32>
    %208 = arith.mulf %207, %136 : vector<8x128xf32>
    %209 = vector.broadcast %1 : f32 to vector<8x128xf32>
    %210 = arith.mulf %209, %192 : vector<8x128xf32>
    %211 = arith.subf %208, %210 : vector<8x128xf32>
    %212 = vector.broadcast %4 : f32 to vector<8x128xf32>
    %213 = arith.mulf %212, %63 : vector<8x128xf32>
    %214 = arith.addf %211, %213 : vector<8x128xf32>
    %cst_125 = arith.constant 0.000000e+00 : f32
    %215 = arith.subf %cst_125, %0 : f32
    %216 = vector.broadcast %215 : f32 to vector<8x128xf32>
    %217 = arith.mulf %216, %137 : vector<8x128xf32>
    %218 = vector.broadcast %1 : f32 to vector<8x128xf32>
    %219 = arith.mulf %218, %196 : vector<8x128xf32>
    %220 = arith.subf %217, %219 : vector<8x128xf32>
    %221 = vector.broadcast %4 : f32 to vector<8x128xf32>
    %222 = arith.mulf %221, %65 : vector<8x128xf32>
    %223 = arith.addf %220, %222 : vector<8x128xf32>
    %224 = arith.mulf %39, %103 : vector<8x128xf32>
    %225 = arith.mulf %39, %106 : vector<8x128xf32>
    %226 = arith.mulf %39, %109 : vector<8x128xf32>
    %227 = arith.mulf %37, %112 : vector<8x128xf32>
    %228 = arith.mulf %37, %117 : vector<8x128xf32>
    %229 = arith.mulf %37, %120 : vector<8x128xf32>
    %230 = arith.subf %224, %227 : vector<8x128xf32>
    %231 = arith.subf %225, %228 : vector<8x128xf32>
    %232 = arith.subf %226, %229 : vector<8x128xf32>
    %233 = arith.mulf %205, %123 : vector<8x128xf32>
    %234 = arith.mulf %214, %126 : vector<8x128xf32>
    %235 = arith.addf %233, %234 : vector<8x128xf32>
    %236 = arith.mulf %223, %131 : vector<8x128xf32>
    %237 = arith.addf %235, %236 : vector<8x128xf32>
    %cst_126 = arith.constant 0.000000e+00 : f32
    %238 = vector.broadcast %cst_126 : f32 to vector<8x128xf32>
    %239 = arith.subf %238, %237 : vector<8x128xf32>
    %240 = arith.mulf %163, %230 : vector<8x128xf32>
    %241 = arith.mulf %168, %231 : vector<8x128xf32>
    %242 = arith.addf %240, %241 : vector<8x128xf32>
    %243 = arith.mulf %175, %232 : vector<8x128xf32>
    %244 = arith.addf %242, %243 : vector<8x128xf32>
    %245 = arith.subf %239, %244 : vector<8x128xf32>
    %246 = vector.broadcast %6 : f32 to vector<8x128xf32>
    %247 = arith.mulf %245, %246 : vector<8x128xf32>
    %cst_127 = arith.constant 0.000000e+00 : f32
    %248 = vector.broadcast %cst_127 : f32 to vector<8x128xf32>
    %249 = arith.subf %248, %247 : vector<8x128xf32>
    %250 = arith.mulf %249, %123 : vector<8x128xf32>
    %251 = arith.mulf %184, %230 : vector<8x128xf32>
    %252 = arith.subf %250, %251 : vector<8x128xf32>
    %253 = arith.subf %252, %61 : vector<8x128xf32>
    %cst_128 = arith.constant 0.000000e+00 : f32
    %254 = vector.broadcast %cst_128 : f32 to vector<8x128xf32>
    %255 = arith.subf %254, %247 : vector<8x128xf32>
    %256 = arith.mulf %255, %126 : vector<8x128xf32>
    %257 = arith.mulf %184, %231 : vector<8x128xf32>
    %258 = arith.subf %256, %257 : vector<8x128xf32>
    %259 = arith.subf %258, %63 : vector<8x128xf32>
    %cst_129 = arith.constant 0.000000e+00 : f32
    %260 = vector.broadcast %cst_129 : f32 to vector<8x128xf32>
    %261 = arith.subf %260, %247 : vector<8x128xf32>
    %262 = arith.mulf %261, %131 : vector<8x128xf32>
    %263 = arith.mulf %184, %232 : vector<8x128xf32>
    %264 = arith.subf %262, %263 : vector<8x128xf32>
    %265 = arith.subf %264, %65 : vector<8x128xf32>
    %cst_130 = arith.constant 0.000000e+00 : f32
    %266 = arith.subf %cst_130, %0 : f32
    %267 = vector.broadcast %266 : f32 to vector<8x128xf32>
    %268 = arith.mulf %267, %188 : vector<8x128xf32>
    %269 = vector.broadcast %1 : f32 to vector<8x128xf32>
    %270 = arith.mulf %269, %253 : vector<8x128xf32>
    %271 = arith.subf %268, %270 : vector<8x128xf32>
    %272 = vector.broadcast %4 : f32 to vector<8x128xf32>
    %273 = arith.mulf %272, %67 : vector<8x128xf32>
    %274 = arith.addf %271, %273 : vector<8x128xf32>
    %cst_131 = arith.constant 0.000000e+00 : f32
    %275 = arith.subf %cst_131, %0 : f32
    %276 = vector.broadcast %275 : f32 to vector<8x128xf32>
    %277 = arith.mulf %276, %192 : vector<8x128xf32>
    %278 = vector.broadcast %1 : f32 to vector<8x128xf32>
    %279 = arith.mulf %278, %259 : vector<8x128xf32>
    %280 = arith.subf %277, %279 : vector<8x128xf32>
    %281 = vector.broadcast %4 : f32 to vector<8x128xf32>
    %282 = arith.mulf %281, %69 : vector<8x128xf32>
    %283 = arith.addf %280, %282 : vector<8x128xf32>
    %cst_132 = arith.constant 0.000000e+00 : f32
    %284 = arith.subf %cst_132, %0 : f32
    %285 = vector.broadcast %284 : f32 to vector<8x128xf32>
    %286 = arith.mulf %285, %196 : vector<8x128xf32>
    %287 = vector.broadcast %1 : f32 to vector<8x128xf32>
    %288 = arith.mulf %287, %265 : vector<8x128xf32>
    %289 = arith.subf %286, %288 : vector<8x128xf32>
    %290 = vector.broadcast %4 : f32 to vector<8x128xf32>
    %291 = arith.mulf %290, %71 : vector<8x128xf32>
    %292 = arith.addf %289, %291 : vector<8x128xf32>
    %293 = arith.mulf %163, %163 : vector<8x128xf32>
    %294 = arith.mulf %168, %168 : vector<8x128xf32>
    %295 = arith.addf %293, %294 : vector<8x128xf32>
    %296 = arith.mulf %175, %175 : vector<8x128xf32>
    %297 = arith.addf %295, %296 : vector<8x128xf32>
    %298 = math.rsqrt %297 : vector<8x128xf32>
    %cst_133 = arith.constant 0.000000e+00 : f32
    %299 = vector.broadcast %cst_133 : f32 to vector<8x128xf32>
    %300 = arith.subf %299, %298 : vector<8x128xf32>
    %301 = arith.mulf %300, %163 : vector<8x128xf32>
    %302 = arith.mulf %300, %168 : vector<8x128xf32>
    %303 = arith.mulf %300, %175 : vector<8x128xf32>
    %304 = arith.mulf %205, %205 : vector<8x128xf32>
    %305 = arith.mulf %214, %214 : vector<8x128xf32>
    %306 = arith.addf %304, %305 : vector<8x128xf32>
    %307 = arith.mulf %223, %223 : vector<8x128xf32>
    %308 = arith.addf %306, %307 : vector<8x128xf32>
    %309 = math.rsqrt %308 : vector<8x128xf32>
    %cst_134 = arith.constant 0.000000e+00 : f32
    %310 = vector.broadcast %cst_134 : f32 to vector<8x128xf32>
    %311 = arith.subf %310, %309 : vector<8x128xf32>
    %312 = arith.mulf %311, %205 : vector<8x128xf32>
    %313 = arith.mulf %311, %214 : vector<8x128xf32>
    %314 = arith.mulf %311, %223 : vector<8x128xf32>
    %315 = arith.mulf %274, %274 : vector<8x128xf32>
    %316 = arith.mulf %283, %283 : vector<8x128xf32>
    %317 = arith.addf %315, %316 : vector<8x128xf32>
    %318 = arith.mulf %292, %292 : vector<8x128xf32>
    %319 = arith.addf %317, %318 : vector<8x128xf32>
    %320 = math.rsqrt %319 : vector<8x128xf32>
    %cst_135 = arith.constant 0.000000e+00 : f32
    %321 = vector.broadcast %cst_135 : f32 to vector<8x128xf32>
    %322 = arith.subf %321, %320 : vector<8x128xf32>
    %323 = arith.mulf %322, %274 : vector<8x128xf32>
    %324 = arith.mulf %322, %283 : vector<8x128xf32>
    %325 = arith.mulf %322, %292 : vector<8x128xf32>
    %326 = arith.mulf %302, %77 : vector<8x128xf32>
    %327 = arith.mulf %303, %75 : vector<8x128xf32>
    %328 = arith.subf %326, %327 : vector<8x128xf32>
    %329 = arith.mulf %303, %73 : vector<8x128xf32>
    %330 = arith.mulf %301, %77 : vector<8x128xf32>
    %331 = arith.subf %329, %330 : vector<8x128xf32>
    %332 = arith.mulf %301, %75 : vector<8x128xf32>
    %333 = arith.mulf %302, %73 : vector<8x128xf32>
    %334 = arith.subf %332, %333 : vector<8x128xf32>
    %335 = arith.mulf %313, %77 : vector<8x128xf32>
    %336 = arith.mulf %314, %75 : vector<8x128xf32>
    %337 = arith.subf %335, %336 : vector<8x128xf32>
    %338 = arith.mulf %314, %73 : vector<8x128xf32>
    %339 = arith.mulf %312, %77 : vector<8x128xf32>
    %340 = arith.subf %338, %339 : vector<8x128xf32>
    %341 = arith.mulf %312, %75 : vector<8x128xf32>
    %342 = arith.mulf %313, %73 : vector<8x128xf32>
    %343 = arith.subf %341, %342 : vector<8x128xf32>
    %344 = arith.mulf %302, %83 : vector<8x128xf32>
    %345 = arith.mulf %303, %81 : vector<8x128xf32>
    %346 = arith.subf %344, %345 : vector<8x128xf32>
    %347 = arith.mulf %303, %79 : vector<8x128xf32>
    %348 = arith.mulf %301, %83 : vector<8x128xf32>
    %349 = arith.subf %347, %348 : vector<8x128xf32>
    %350 = arith.mulf %301, %81 : vector<8x128xf32>
    %351 = arith.mulf %302, %79 : vector<8x128xf32>
    %352 = arith.subf %350, %351 : vector<8x128xf32>
    %cst_136 = arith.constant 0.000000e+00 : f32
    %353 = vector.broadcast %cst_136 : f32 to vector<8x128xf32>
    %354 = arith.addf %353, %337 : vector<8x128xf32>
    %355 = arith.addf %354, %346 : vector<8x128xf32>
    %cst_137 = arith.constant 0.000000e+00 : f32
    %356 = vector.broadcast %cst_137 : f32 to vector<8x128xf32>
    %357 = arith.addf %356, %340 : vector<8x128xf32>
    %358 = arith.addf %357, %349 : vector<8x128xf32>
    %cst_138 = arith.constant 0.000000e+00 : f32
    %359 = vector.broadcast %cst_138 : f32 to vector<8x128xf32>
    %360 = arith.addf %359, %343 : vector<8x128xf32>
    %361 = arith.addf %360, %352 : vector<8x128xf32>
    %362 = arith.mulf %324, %77 : vector<8x128xf32>
    %363 = arith.mulf %325, %75 : vector<8x128xf32>
    %364 = arith.subf %362, %363 : vector<8x128xf32>
    %365 = arith.mulf %325, %73 : vector<8x128xf32>
    %366 = arith.mulf %323, %77 : vector<8x128xf32>
    %367 = arith.subf %365, %366 : vector<8x128xf32>
    %368 = arith.mulf %323, %75 : vector<8x128xf32>
    %369 = arith.mulf %324, %73 : vector<8x128xf32>
    %370 = arith.subf %368, %369 : vector<8x128xf32>
    %371 = arith.mulf %313, %83 : vector<8x128xf32>
    %372 = arith.mulf %314, %81 : vector<8x128xf32>
    %373 = arith.subf %371, %372 : vector<8x128xf32>
    %374 = arith.mulf %314, %79 : vector<8x128xf32>
    %375 = arith.mulf %312, %83 : vector<8x128xf32>
    %376 = arith.subf %374, %375 : vector<8x128xf32>
    %377 = arith.mulf %312, %81 : vector<8x128xf32>
    %378 = arith.mulf %313, %79 : vector<8x128xf32>
    %379 = arith.subf %377, %378 : vector<8x128xf32>
    %cst_139 = arith.constant 2.000000e+00 : f32
    %380 = vector.broadcast %cst_139 : f32 to vector<8x128xf32>
    %381 = arith.mulf %380, %373 : vector<8x128xf32>
    %cst_140 = arith.constant 2.000000e+00 : f32
    %382 = vector.broadcast %cst_140 : f32 to vector<8x128xf32>
    %383 = arith.mulf %382, %376 : vector<8x128xf32>
    %cst_141 = arith.constant 2.000000e+00 : f32
    %384 = vector.broadcast %cst_141 : f32 to vector<8x128xf32>
    %385 = arith.mulf %384, %379 : vector<8x128xf32>
    %386 = arith.mulf %302, %89 : vector<8x128xf32>
    %387 = arith.mulf %303, %87 : vector<8x128xf32>
    %388 = arith.subf %386, %387 : vector<8x128xf32>
    %389 = arith.mulf %303, %85 : vector<8x128xf32>
    %390 = arith.mulf %301, %89 : vector<8x128xf32>
    %391 = arith.subf %389, %390 : vector<8x128xf32>
    %392 = arith.mulf %301, %87 : vector<8x128xf32>
    %393 = arith.mulf %302, %85 : vector<8x128xf32>
    %394 = arith.subf %392, %393 : vector<8x128xf32>
    %cst_142 = arith.constant 0.000000e+00 : f32
    %395 = vector.broadcast %cst_142 : f32 to vector<8x128xf32>
    %396 = arith.addf %395, %364 : vector<8x128xf32>
    %397 = arith.addf %396, %381 : vector<8x128xf32>
    %398 = arith.addf %397, %388 : vector<8x128xf32>
    %cst_143 = arith.constant 0.000000e+00 : f32
    %399 = vector.broadcast %cst_143 : f32 to vector<8x128xf32>
    %400 = arith.addf %399, %367 : vector<8x128xf32>
    %401 = arith.addf %400, %383 : vector<8x128xf32>
    %402 = arith.addf %401, %391 : vector<8x128xf32>
    %cst_144 = arith.constant 0.000000e+00 : f32
    %403 = vector.broadcast %cst_144 : f32 to vector<8x128xf32>
    %404 = arith.addf %403, %370 : vector<8x128xf32>
    %405 = arith.addf %404, %385 : vector<8x128xf32>
    %406 = arith.addf %405, %394 : vector<8x128xf32>
    %407 = arith.mulf %328, %328 : vector<8x128xf32>
    %408 = arith.mulf %331, %331 : vector<8x128xf32>
    %409 = arith.addf %407, %408 : vector<8x128xf32>
    %410 = arith.mulf %334, %334 : vector<8x128xf32>
    %411 = arith.addf %409, %410 : vector<8x128xf32>
    %412 = math.rsqrt %411 : vector<8x128xf32>
    %413 = arith.mulf %355, %355 : vector<8x128xf32>
    %414 = arith.mulf %358, %358 : vector<8x128xf32>
    %415 = arith.addf %413, %414 : vector<8x128xf32>
    %416 = arith.mulf %361, %361 : vector<8x128xf32>
    %417 = arith.addf %415, %416 : vector<8x128xf32>
    %418 = math.rsqrt %417 : vector<8x128xf32>
    %419 = arith.mulf %398, %398 : vector<8x128xf32>
    %420 = arith.mulf %402, %402 : vector<8x128xf32>
    %421 = arith.addf %419, %420 : vector<8x128xf32>
    %422 = arith.mulf %406, %406 : vector<8x128xf32>
    %423 = arith.addf %421, %422 : vector<8x128xf32>
    %424 = math.rsqrt %423 : vector<8x128xf32>
    %425 = arith.mulf %412, %328 : vector<8x128xf32>
    %426 = arith.mulf %412, %331 : vector<8x128xf32>
    %427 = arith.mulf %412, %334 : vector<8x128xf32>
    %428 = arith.mulf %418, %425 : vector<8x128xf32>
    %429 = arith.mulf %418, %426 : vector<8x128xf32>
    %430 = arith.mulf %418, %427 : vector<8x128xf32>
    %431 = arith.mulf %424, %425 : vector<8x128xf32>
    %432 = arith.mulf %424, %426 : vector<8x128xf32>
    %433 = arith.mulf %424, %427 : vector<8x128xf32>
    %434 = arith.mulf %426, %303 : vector<8x128xf32>
    %435 = arith.mulf %427, %302 : vector<8x128xf32>
    %436 = arith.subf %434, %435 : vector<8x128xf32>
    %437 = arith.mulf %427, %301 : vector<8x128xf32>
    %438 = arith.mulf %425, %303 : vector<8x128xf32>
    %439 = arith.subf %437, %438 : vector<8x128xf32>
    %440 = arith.mulf %425, %302 : vector<8x128xf32>
    %441 = arith.mulf %426, %301 : vector<8x128xf32>
    %442 = arith.subf %440, %441 : vector<8x128xf32>
    %443 = arith.mulf %425, %425 : vector<8x128xf32>
    %444 = arith.mulf %426, %426 : vector<8x128xf32>
    %445 = arith.addf %443, %444 : vector<8x128xf32>
    %446 = arith.mulf %427, %427 : vector<8x128xf32>
    %447 = arith.addf %445, %446 : vector<8x128xf32>
    %448 = math.rsqrt %447 : vector<8x128xf32>
    %449 = arith.mulf %448, %425 : vector<8x128xf32>
    %450 = arith.mulf %448, %426 : vector<8x128xf32>
    %451 = arith.mulf %448, %427 : vector<8x128xf32>
    %452 = arith.mulf %449, %312 : vector<8x128xf32>
    %453 = arith.mulf %450, %313 : vector<8x128xf32>
    %454 = arith.addf %452, %453 : vector<8x128xf32>
    %455 = arith.mulf %451, %314 : vector<8x128xf32>
    %456 = arith.addf %454, %455 : vector<8x128xf32>
    %cst_145 = arith.constant 0.000000e+00 : f32
    %457 = vector.broadcast %cst_145 : f32 to vector<8x128xf32>
    %458 = arith.subf %457, %456 : vector<8x128xf32>
    %459 = arith.mulf %436, %312 : vector<8x128xf32>
    %460 = arith.mulf %439, %313 : vector<8x128xf32>
    %461 = arith.addf %459, %460 : vector<8x128xf32>
    %462 = arith.mulf %442, %314 : vector<8x128xf32>
    %463 = arith.addf %461, %462 : vector<8x128xf32>
    %464 = arith.mulf %436, %428 : vector<8x128xf32>
    %465 = arith.mulf %439, %429 : vector<8x128xf32>
    %466 = arith.addf %464, %465 : vector<8x128xf32>
    %467 = arith.mulf %442, %430 : vector<8x128xf32>
    %468 = arith.addf %466, %467 : vector<8x128xf32>
    %cst_146 = arith.constant 0.000000e+00 : f32
    %469 = vector.broadcast %cst_146 : f32 to vector<8x128xf32>
    %470 = arith.subf %469, %468 : vector<8x128xf32>
    %471 = arith.mulf %449, %323 : vector<8x128xf32>
    %472 = arith.mulf %450, %324 : vector<8x128xf32>
    %473 = arith.addf %471, %472 : vector<8x128xf32>
    %474 = arith.mulf %451, %325 : vector<8x128xf32>
    %475 = arith.addf %473, %474 : vector<8x128xf32>
    %476 = arith.mulf %463, %470 : vector<8x128xf32>
    %477 = arith.subf %475, %476 : vector<8x128xf32>
    %cst_147 = arith.constant 0.000000e+00 : f32
    %478 = vector.broadcast %cst_147 : f32 to vector<8x128xf32>
    %479 = arith.subf %478, %477 : vector<8x128xf32>
    %480 = arith.mulf %436, %323 : vector<8x128xf32>
    %481 = arith.mulf %439, %324 : vector<8x128xf32>
    %482 = arith.addf %480, %481 : vector<8x128xf32>
    %483 = arith.mulf %442, %325 : vector<8x128xf32>
    %484 = arith.addf %482, %483 : vector<8x128xf32>
    %485 = arith.mulf %458, %470 : vector<8x128xf32>
    %486 = arith.subf %484, %485 : vector<8x128xf32>
    %487 = arith.mulf %436, %431 : vector<8x128xf32>
    %488 = arith.mulf %439, %432 : vector<8x128xf32>
    %489 = arith.addf %487, %488 : vector<8x128xf32>
    %490 = arith.mulf %442, %433 : vector<8x128xf32>
    %491 = arith.addf %489, %490 : vector<8x128xf32>
    %492 = arith.mulf %458, %463 : vector<8x128xf32>
    %493 = arith.subf %491, %492 : vector<8x128xf32>
    %cst_148 = arith.constant 0.000000e+00 : f32
    %494 = vector.broadcast %cst_148 : f32 to vector<8x128xf32>
    %495 = arith.subf %494, %493 : vector<8x128xf32>
    %496 = arith.mulf %449, %123 : vector<8x128xf32>
    %497 = arith.mulf %450, %126 : vector<8x128xf32>
    %498 = arith.addf %496, %497 : vector<8x128xf32>
    %499 = arith.mulf %451, %131 : vector<8x128xf32>
    %500 = arith.addf %498, %499 : vector<8x128xf32>
    %501 = arith.mulf %112, %301 : vector<8x128xf32>
    %502 = arith.mulf %117, %302 : vector<8x128xf32>
    %503 = arith.addf %501, %502 : vector<8x128xf32>
    %504 = arith.mulf %120, %303 : vector<8x128xf32>
    %505 = arith.addf %503, %504 : vector<8x128xf32>
    %506 = arith.subf %500, %505 : vector<8x128xf32>
    %507 = arith.mulf %436, %123 : vector<8x128xf32>
    %508 = arith.mulf %439, %126 : vector<8x128xf32>
    %509 = arith.addf %507, %508 : vector<8x128xf32>
    %510 = arith.mulf %442, %131 : vector<8x128xf32>
    %511 = arith.addf %509, %510 : vector<8x128xf32>
    %512 = arith.mulf %103, %301 : vector<8x128xf32>
    %513 = arith.mulf %106, %302 : vector<8x128xf32>
    %514 = arith.addf %512, %513 : vector<8x128xf32>
    %515 = arith.mulf %109, %303 : vector<8x128xf32>
    %516 = arith.addf %514, %515 : vector<8x128xf32>
    %517 = arith.subf %511, %516 : vector<8x128xf32>
    %518 = arith.mulf %436, %112 : vector<8x128xf32>
    %519 = arith.mulf %439, %117 : vector<8x128xf32>
    %520 = arith.addf %518, %519 : vector<8x128xf32>
    %521 = arith.mulf %442, %120 : vector<8x128xf32>
    %522 = arith.addf %520, %521 : vector<8x128xf32>
    %523 = arith.mulf %103, %449 : vector<8x128xf32>
    %524 = arith.mulf %106, %450 : vector<8x128xf32>
    %525 = arith.addf %523, %524 : vector<8x128xf32>
    %526 = arith.mulf %109, %451 : vector<8x128xf32>
    %527 = arith.addf %525, %526 : vector<8x128xf32>
    %528 = arith.subf %522, %527 : vector<8x128xf32>
    %cst_149 = arith.constant -5.000000e-01 : f32
    %529 = vector.broadcast %cst_149 : f32 to vector<8x128xf32>
    %530 = arith.mulf %529, %506 : vector<8x128xf32>
    %cst_150 = arith.constant 5.000000e-01 : f32
    %531 = vector.broadcast %cst_150 : f32 to vector<8x128xf32>
    %532 = arith.mulf %531, %517 : vector<8x128xf32>
    %cst_151 = arith.constant -5.000000e-01 : f32
    %533 = vector.broadcast %cst_151 : f32 to vector<8x128xf32>
    %534 = arith.mulf %533, %528 : vector<8x128xf32>
    %535 = arith.mulf %458, %436 : vector<8x128xf32>
    %536 = arith.mulf %458, %439 : vector<8x128xf32>
    %537 = arith.mulf %458, %442 : vector<8x128xf32>
    %538 = arith.mulf %463, %449 : vector<8x128xf32>
    %539 = arith.mulf %463, %450 : vector<8x128xf32>
    %540 = arith.mulf %463, %451 : vector<8x128xf32>
    %541 = arith.mulf %470, %301 : vector<8x128xf32>
    %542 = arith.mulf %470, %302 : vector<8x128xf32>
    %543 = arith.mulf %470, %303 : vector<8x128xf32>
    %cst_152 = arith.constant 0.000000e+00 : f32
    %544 = vector.broadcast %cst_152 : f32 to vector<8x128xf32>
    %545 = arith.addf %544, %535 : vector<8x128xf32>
    %546 = arith.addf %545, %538 : vector<8x128xf32>
    %547 = arith.addf %546, %541 : vector<8x128xf32>
    %cst_153 = arith.constant 0.000000e+00 : f32
    %548 = vector.broadcast %cst_153 : f32 to vector<8x128xf32>
    %549 = arith.addf %548, %536 : vector<8x128xf32>
    %550 = arith.addf %549, %539 : vector<8x128xf32>
    %551 = arith.addf %550, %542 : vector<8x128xf32>
    %cst_154 = arith.constant 0.000000e+00 : f32
    %552 = vector.broadcast %cst_154 : f32 to vector<8x128xf32>
    %553 = arith.addf %552, %537 : vector<8x128xf32>
    %554 = arith.addf %553, %540 : vector<8x128xf32>
    %555 = arith.addf %554, %543 : vector<8x128xf32>
    %556 = arith.mulf %479, %436 : vector<8x128xf32>
    %557 = arith.mulf %479, %439 : vector<8x128xf32>
    %558 = arith.mulf %479, %442 : vector<8x128xf32>
    %559 = arith.mulf %486, %449 : vector<8x128xf32>
    %560 = arith.mulf %486, %450 : vector<8x128xf32>
    %561 = arith.mulf %486, %451 : vector<8x128xf32>
    %562 = arith.mulf %495, %301 : vector<8x128xf32>
    %563 = arith.mulf %495, %302 : vector<8x128xf32>
    %564 = arith.mulf %495, %303 : vector<8x128xf32>
    %cst_155 = arith.constant 0.000000e+00 : f32
    %565 = vector.broadcast %cst_155 : f32 to vector<8x128xf32>
    %566 = arith.addf %565, %556 : vector<8x128xf32>
    %567 = arith.addf %566, %559 : vector<8x128xf32>
    %568 = arith.addf %567, %562 : vector<8x128xf32>
    %cst_156 = arith.constant 0.000000e+00 : f32
    %569 = vector.broadcast %cst_156 : f32 to vector<8x128xf32>
    %570 = arith.addf %569, %557 : vector<8x128xf32>
    %571 = arith.addf %570, %560 : vector<8x128xf32>
    %572 = arith.addf %571, %563 : vector<8x128xf32>
    %cst_157 = arith.constant 0.000000e+00 : f32
    %573 = vector.broadcast %cst_157 : f32 to vector<8x128xf32>
    %574 = arith.addf %573, %558 : vector<8x128xf32>
    %575 = arith.addf %574, %561 : vector<8x128xf32>
    %576 = arith.addf %575, %564 : vector<8x128xf32>
    %577 = arith.mulf %103, %547 : vector<8x128xf32>
    %578 = arith.mulf %106, %551 : vector<8x128xf32>
    %579 = arith.addf %577, %578 : vector<8x128xf32>
    %580 = arith.mulf %109, %555 : vector<8x128xf32>
    %581 = arith.addf %579, %580 : vector<8x128xf32>
    %582 = arith.mulf %112, %547 : vector<8x128xf32>
    %583 = arith.mulf %117, %551 : vector<8x128xf32>
    %584 = arith.addf %582, %583 : vector<8x128xf32>
    %585 = arith.mulf %120, %555 : vector<8x128xf32>
    %586 = arith.addf %584, %585 : vector<8x128xf32>
    %587 = arith.mulf %123, %547 : vector<8x128xf32>
    %588 = arith.mulf %126, %551 : vector<8x128xf32>
    %589 = arith.addf %587, %588 : vector<8x128xf32>
    %590 = arith.mulf %131, %555 : vector<8x128xf32>
    %591 = arith.addf %589, %590 : vector<8x128xf32>
    %592 = arith.mulf %103, %568 : vector<8x128xf32>
    %593 = arith.mulf %106, %572 : vector<8x128xf32>
    %594 = arith.addf %592, %593 : vector<8x128xf32>
    %595 = arith.mulf %109, %576 : vector<8x128xf32>
    %596 = arith.addf %594, %595 : vector<8x128xf32>
    %597 = arith.mulf %112, %568 : vector<8x128xf32>
    %598 = arith.mulf %117, %572 : vector<8x128xf32>
    %599 = arith.addf %597, %598 : vector<8x128xf32>
    %600 = arith.mulf %120, %576 : vector<8x128xf32>
    %601 = arith.addf %599, %600 : vector<8x128xf32>
    %602 = arith.mulf %123, %568 : vector<8x128xf32>
    %603 = arith.mulf %126, %572 : vector<8x128xf32>
    %604 = arith.addf %602, %603 : vector<8x128xf32>
    %605 = arith.mulf %131, %576 : vector<8x128xf32>
    %606 = arith.addf %604, %605 : vector<8x128xf32>
    %607 = arith.subf %37, %581 : vector<8x128xf32>
    %608 = arith.subf %39, %586 : vector<8x128xf32>
    %609 = arith.subf %41, %591 : vector<8x128xf32>
    %610 = vector.broadcast %7 : f32 to vector<8x128xf32>
    %611 = arith.mulf %610, %37 : vector<8x128xf32>
    %612 = vector.broadcast %8 : f32 to vector<8x128xf32>
    %613 = arith.mulf %612, %39 : vector<8x128xf32>
    %614 = arith.addf %611, %613 : vector<8x128xf32>
    %615 = vector.broadcast %9 : f32 to vector<8x128xf32>
    %616 = arith.mulf %615, %41 : vector<8x128xf32>
    %617 = arith.addf %614, %616 : vector<8x128xf32>
    %618 = vector.broadcast %10 : f32 to vector<8x128xf32>
    %619 = arith.mulf %618, %37 : vector<8x128xf32>
    %620 = vector.broadcast %11 : f32 to vector<8x128xf32>
    %621 = arith.mulf %620, %39 : vector<8x128xf32>
    %622 = arith.addf %619, %621 : vector<8x128xf32>
    %623 = vector.broadcast %12 : f32 to vector<8x128xf32>
    %624 = arith.mulf %623, %41 : vector<8x128xf32>
    %625 = arith.addf %622, %624 : vector<8x128xf32>
    %626 = vector.broadcast %13 : f32 to vector<8x128xf32>
    %627 = arith.mulf %626, %37 : vector<8x128xf32>
    %628 = vector.broadcast %14 : f32 to vector<8x128xf32>
    %629 = arith.mulf %628, %39 : vector<8x128xf32>
    %630 = arith.addf %627, %629 : vector<8x128xf32>
    %631 = vector.broadcast %15 : f32 to vector<8x128xf32>
    %632 = arith.mulf %631, %41 : vector<8x128xf32>
    %633 = arith.addf %630, %632 : vector<8x128xf32>
    %634 = vector.broadcast %2 : f32 to vector<8x128xf32>
    %635 = arith.mulf %634, %530 : vector<8x128xf32>
    %636 = vector.broadcast %2 : f32 to vector<8x128xf32>
    %637 = arith.mulf %636, %532 : vector<8x128xf32>
    %638 = vector.broadcast %2 : f32 to vector<8x128xf32>
    %639 = arith.mulf %638, %534 : vector<8x128xf32>
    %640 = vector.broadcast %3 : f32 to vector<8x128xf32>
    %641 = arith.mulf %640, %607 : vector<8x128xf32>
    %642 = vector.broadcast %3 : f32 to vector<8x128xf32>
    %643 = arith.mulf %642, %608 : vector<8x128xf32>
    %644 = vector.broadcast %3 : f32 to vector<8x128xf32>
    %645 = arith.mulf %644, %609 : vector<8x128xf32>
    %cst_158 = arith.constant 0.000000e+00 : f32
    %646 = vector.broadcast %cst_158 : f32 to vector<8x128xf32>
    %647 = arith.addf %646, %635 : vector<8x128xf32>
    %648 = arith.addf %647, %641 : vector<8x128xf32>
    %cst_159 = arith.constant 0.000000e+00 : f32
    %649 = vector.broadcast %cst_159 : f32 to vector<8x128xf32>
    %650 = arith.addf %649, %637 : vector<8x128xf32>
    %651 = arith.addf %650, %643 : vector<8x128xf32>
    %cst_160 = arith.constant 0.000000e+00 : f32
    %652 = vector.broadcast %cst_160 : f32 to vector<8x128xf32>
    %653 = arith.addf %652, %639 : vector<8x128xf32>
    %654 = arith.addf %653, %645 : vector<8x128xf32>
    %cst_161 = arith.constant 0.000000e+00 : f32
    %655 = vector.broadcast %cst_161 : f32 to vector<8x128xf32>
    %656 = arith.subf %655, %648 : vector<8x128xf32>
    %cst_162 = arith.constant 0.000000e+00 : f32
    %657 = vector.broadcast %cst_162 : f32 to vector<8x128xf32>
    %658 = arith.subf %657, %651 : vector<8x128xf32>
    %cst_163 = arith.constant 0.000000e+00 : f32
    %659 = vector.broadcast %cst_163 : f32 to vector<8x128xf32>
    %660 = arith.subf %659, %654 : vector<8x128xf32>
    %661 = arith.mulf %39, %633 : vector<8x128xf32>
    %662 = arith.mulf %41, %625 : vector<8x128xf32>
    %663 = arith.subf %661, %662 : vector<8x128xf32>
    %664 = arith.mulf %41, %617 : vector<8x128xf32>
    %665 = arith.mulf %37, %633 : vector<8x128xf32>
    %666 = arith.subf %664, %665 : vector<8x128xf32>
    %667 = arith.mulf %37, %625 : vector<8x128xf32>
    %668 = arith.mulf %39, %617 : vector<8x128xf32>
    %669 = arith.subf %667, %668 : vector<8x128xf32>
    %cst_164 = arith.constant 0.000000e+00 : f32
    %670 = vector.broadcast %cst_164 : f32 to vector<8x128xf32>
    %671 = arith.addf %670, %656 : vector<8x128xf32>
    %672 = arith.addf %671, %663 : vector<8x128xf32>
    %cst_165 = arith.constant 0.000000e+00 : f32
    %673 = vector.broadcast %cst_165 : f32 to vector<8x128xf32>
    %674 = arith.addf %673, %658 : vector<8x128xf32>
    %675 = arith.addf %674, %666 : vector<8x128xf32>
    %cst_166 = arith.constant 0.000000e+00 : f32
    %676 = vector.broadcast %cst_166 : f32 to vector<8x128xf32>
    %677 = arith.addf %676, %660 : vector<8x128xf32>
    %678 = arith.addf %677, %669 : vector<8x128xf32>
    %679 = arith.subf %581, %596 : vector<8x128xf32>
    %680 = arith.subf %586, %601 : vector<8x128xf32>
    %681 = arith.subf %591, %606 : vector<8x128xf32>
    %682 = arith.mulf %39, %681 : vector<8x128xf32>
    %683 = arith.mulf %41, %680 : vector<8x128xf32>
    %684 = arith.subf %682, %683 : vector<8x128xf32>
    %685 = arith.mulf %41, %679 : vector<8x128xf32>
    %686 = arith.mulf %37, %681 : vector<8x128xf32>
    %687 = arith.subf %685, %686 : vector<8x128xf32>
    %688 = arith.mulf %37, %680 : vector<8x128xf32>
    %689 = arith.mulf %39, %679 : vector<8x128xf32>
    %690 = arith.subf %688, %689 : vector<8x128xf32>
    %691 = vector.broadcast %7 : f32 to vector<8x128xf32>
    %692 = arith.mulf %691, %684 : vector<8x128xf32>
    %693 = vector.broadcast %8 : f32 to vector<8x128xf32>
    %694 = arith.mulf %693, %687 : vector<8x128xf32>
    %695 = arith.addf %692, %694 : vector<8x128xf32>
    %696 = vector.broadcast %9 : f32 to vector<8x128xf32>
    %697 = arith.mulf %696, %690 : vector<8x128xf32>
    %698 = arith.addf %695, %697 : vector<8x128xf32>
    %699 = vector.broadcast %10 : f32 to vector<8x128xf32>
    %700 = arith.mulf %699, %684 : vector<8x128xf32>
    %701 = vector.broadcast %11 : f32 to vector<8x128xf32>
    %702 = arith.mulf %701, %687 : vector<8x128xf32>
    %703 = arith.addf %700, %702 : vector<8x128xf32>
    %704 = vector.broadcast %12 : f32 to vector<8x128xf32>
    %705 = arith.mulf %704, %690 : vector<8x128xf32>
    %706 = arith.addf %703, %705 : vector<8x128xf32>
    %707 = vector.broadcast %13 : f32 to vector<8x128xf32>
    %708 = arith.mulf %707, %684 : vector<8x128xf32>
    %709 = vector.broadcast %14 : f32 to vector<8x128xf32>
    %710 = arith.mulf %709, %687 : vector<8x128xf32>
    %711 = arith.addf %708, %710 : vector<8x128xf32>
    %712 = vector.broadcast %15 : f32 to vector<8x128xf32>
    %713 = arith.mulf %712, %690 : vector<8x128xf32>
    %714 = arith.addf %711, %713 : vector<8x128xf32>
    %715 = arith.subf %672, %698 : vector<8x128xf32>
    %716 = arith.subf %675, %706 : vector<8x128xf32>
    %717 = arith.subf %678, %714 : vector<8x128xf32>
    %cst_167 = arith.constant 0.000000e+00 : f32
    %718 = vector.broadcast %cst_167 : f32 to vector<8x128xf32>
    %719 = arith.maximumf %182, %718 : vector<8x128xf32>
    %c0_168 = arith.constant 0 : index
    %c0_169 = arith.constant 0 : index
    %c0_170 = arith.constant 0 : index
    %720 = vector.load %arg4[%c0_168, %c0_169, %c0_170] : memref<4x8x128xf32, #tpu.memory_space<vmem>>, vector<1x8x128xf32>
    %721 = vector.shape_cast %720 : vector<1x8x128xf32> to vector<8x128xf32>
    %722 = vector.shape_cast %719 : vector<8x128xf32> to vector<1x8x128xf32>
    tpu.vector_store %arg4[%c0_168, %c0_169, %c0_170], %722 {strides = array<i32>} : memref<4x8x128xf32, #tpu.memory_space<vmem>>, vector<1x8x128xf32>,
    %c1_171 = arith.constant 1 : index
    %c0_172 = arith.constant 0 : index
    %c0_173 = arith.constant 0 : index
    %723 = vector.load %arg4[%c1_171, %c0_172, %c0_173] : memref<4x8x128xf32, #tpu.memory_space<vmem>>, vector<1x8x128xf32>
    %724 = vector.shape_cast %723 : vector<1x8x128xf32> to vector<8x128xf32>
    %725 = vector.shape_cast %715 : vector<8x128xf32> to vector<1x8x128xf32>
    tpu.vector_store %arg4[%c1_171, %c0_172, %c0_173], %725 {strides = array<i32>} : memref<4x8x128xf32, #tpu.memory_space<vmem>>, vector<1x8x128xf32>,
    %c2_174 = arith.constant 2 : index
    %c0_175 = arith.constant 0 : index
    %c0_176 = arith.constant 0 : index
    %726 = vector.load %arg4[%c2_174, %c0_175, %c0_176] : memref<4x8x128xf32, #tpu.memory_space<vmem>>, vector<1x8x128xf32>
    %727 = vector.shape_cast %726 : vector<1x8x128xf32> to vector<8x128xf32>
    %728 = vector.shape_cast %716 : vector<8x128xf32> to vector<1x8x128xf32>
    tpu.vector_store %arg4[%c2_174, %c0_175, %c0_176], %728 {strides = array<i32>} : memref<4x8x128xf32, #tpu.memory_space<vmem>>, vector<1x8x128xf32>,
    %c3_177 = arith.constant 3 : index
    %c0_178 = arith.constant 0 : index
    %c0_179 = arith.constant 0 : index
    %729 = vector.load %arg4[%c3_177, %c0_178, %c0_179] : memref<4x8x128xf32, #tpu.memory_space<vmem>>, vector<1x8x128xf32>
    %730 = vector.shape_cast %729 : vector<1x8x128xf32> to vector<8x128xf32>
    %731 = vector.shape_cast %717 : vector<8x128xf32> to vector<1x8x128xf32>
    tpu.vector_store %arg4[%c3_177, %c0_178, %c0_179], %731 {strides = array<i32>} : memref<4x8x128xf32, #tpu.memory_space<vmem>>, vector<1x8x128xf32>,
    return
  }
  func.func @transform_0(%arg0: i32) -> i32 {
    %c0_i32 = arith.constant 0 : i32
    %c0_i32_0 = arith.constant 0 : i32
    return %c0_i32 : i32
  }
  func.func @transform_1(%arg0: i32) -> (i32, i32, i32) {
    %c0_i32 = arith.constant 0 : i32
    %c0_i32_0 = arith.constant 0 : i32
    %c0_i32_1 = arith.constant 0 : i32
    return %c0_i32, %arg0, %c0_i32_0 : i32, i32, i32
  }
  func.func @transform_2(%arg0: i32) -> (i32, i32, i32) {
    %c0_i32 = arith.constant 0 : i32
    %c0_i32_0 = arith.constant 0 : i32
    %c0_i32_1 = arith.constant 0 : i32
    return %c0_i32, %arg0, %c0_i32_0 : i32, i32, i32
  }
  func.func @transform_3(%arg0: i32) -> (i32, i32, i32) {
    %c0_i32 = arith.constant 0 : i32
    %c0_i32_0 = arith.constant 0 : i32
    %c0_i32_1 = arith.constant 0 : i32
    return %c0_i32, %arg0, %c0_i32_0 : i32, i32, i32
  }
}

</mosaic_0001>

<llo_original>
// kernel: geometric_controller_soa.1
$region0: #{geometric_controller_soa.1}
  #allocation0 [shape = 'u32[]', space=smem, size = 0x4, offset = 0x4, fixed_abs, tag = 'smem constant byte address 0x4 - core index']
  #allocation1 [shape = 'u32[144,128]{1,0:T(1,128)}', space=vmem, size = 0x12000, scoped, tag = 'internal scratch']
  %s0 = inlined_call_operand.vmem [shape: f32[16], index: 0, kind: input, shape index: {}]
  %s1 = inlined_call_operand.vmem [shape: f32[13,16,128], index: 1, kind: input, shape index: {}]
  %s2 = inlined_call_operand.vmem [shape: f32[24,16,128], index: 2, kind: input, shape index: {}]
  %s3 = inlined_call_operand.vmem [shape: f32[4,16,128], index: 3, kind: output, shape index: {}]
  %s4 = sld [smem:[#allocation0]]
  $region159: #{geometric_controller_soa.1} parent=0
    _
  %s6 = ssub.s32 1, %s4
  %s7 = scalar_select 0, %s6, %s4
  $region1: #{geometric_controller_soa.1} parent=0
    #allocation2 [shape = 'u8[512]{0}', space=smem, size = 0x200, scoped, tag = 'input window, operand 0, single buffered']
    #allocation3 [shape = 's32[2]{0}', space=sflag, size = 0x8, scoped, tag = 'scoped memory for geometric_controller_soa.1']
    #allocation4 [shape = 'u8[106496]{0}', space=vmem, size = 0x1a000, scoped, tag = 'input window, operand 1']
    #allocation5 [shape = 'u8[196608]{0}', space=vmem, size = 0x30000, scoped, tag = 'input window, operand 2']
    #allocation6 [shape = 'u8[32768]{0}', space=vmem, size = 0x8000, scoped, tag = 'output window, operand 0']
    %8 = vsyncpa [#allocation3], 0
    loop: start=0, step=1, limit=4
    $region2: #{geometric_controller_soa.1} parent=1 // loop_pre_header
      _
    $region3: #{geometric_controller_soa.1} parent=1 // loop_header
      %s10 = sphi 0, %s14
      %p11 = scmp.ge.s32.totalorder %s10, 4
      %s18 = sphi 0, %s18
      %s20 = sphi 0, %s18
      %s21 = sphi 0, %s20
      %s35 = sphi 0, %s21
      %s41 = sphi 0, %s43
      %s44 = sphi 0, %s41
      %s45 = sphi 0, %s44
      %s61 = sphi 0, %s45
      %s67 = sphi 0, %s69
      %s70 = sphi 0, %s67
      %s71 = sphi 0, %s70
      %s87 = sphi 0, %s71
      %s93 = sphi 0, %s95
      %s96 = sphi 0, %s93
      %s97 = sphi 0, %s96
      %s113 = sphi 0, %s97
    $region4: #{geometric_controller_soa.1} parent=1 // loop_header_branch
      %13 = sbr.rel (%p11) target = $region8
    $region5: #{geometric_controller_soa.1} parent=1 // loop_body
      %s15 = ssub.s32 %s10, 1
      %s16 = ssub.s32 %s10, 2
      %s17 = sadd.s32 %s10, 1
      %s19 = sadd.s32 %s18, 1
      %p22 = scmp.eq.s32.totalorder %s10, 1
      %p23 = scmp.ne.s32.totalorder %s18, %s20
      %p24 = scmp.eq.s32.totalorder %s10, 0
      %p25 = por %p23, %p24
      %p26 = scmp.ne.s32.totalorder %s18, %s20
      %p27 = scmp.eq.s32.totalorder %s15, 1
      %p28 = por %p26, %p27
      %p29 = scmp.ne.s32.totalorder %s20, %s21
      %p30 = scmp.eq.s32.totalorder %s15, 0
      %p31 = por %p29, %p30
      %p32 = scmp.ne.s32.totalorder %s20, %s21
      %p33 = scmp.eq.s32.totalorder %s16, 1
      %p34 = por %p32, %p33
      %p36 = scmp.ne.s32.totalorder %s21, %s35
      %p37 = scmp.eq.s32.totalorder %s16, 0
      %p38 = por %p36, %p37
      %s39 = ssub.s32 %s10, %s17
      %p40 = scmp.eq.s32.totalorder %s39, 0
      %s42 = sadd.s32 %s41, 1
      %s43 = scalar_select %p40, %s41, %s42
      %p46 = pneg %p40
      %p47 = scmp.eq.s32.totalorder %s10, 1
      %p48 = por %p46, %p47
      %p49 = scmp.ne.s32.totalorder %s41, %s44
      %p50 = scmp.eq.s32.totalorder %s10, 0
      %p51 = por %p49, %p50
      %p52 = scmp.ne.s32.totalorder %s41, %s44
      %p53 = scmp.eq.s32.totalorder %s15, 1
      %p54 = por %p52, %p53
      %p55 = scmp.ne.s32.totalorder %s44, %s45
      %p56 = scmp.eq.s32.totalorder %s15, 0
      %p57 = por %p55, %p56
      %p58 = scmp.ne.s32.totalorder %s44, %s45
      %p59 = scmp.eq.s32.totalorder %s16, 1
      %p60 = por %p58, %p59
      %p62 = scmp.ne.s32.totalorder %s45, %s61
      %p63 = scmp.eq.s32.totalorder %s16, 0
      %p64 = por %p62, %p63
      %s65 = ssub.s32 %s10, %s17
      %p66 = scmp.eq.s32.totalorder %s65, 0
      %s68 = sadd.s32 %s67, 1
      %s69 = scalar_select %p66, %s67, %s68
      %p72 = pneg %p66
      %p73 = scmp.eq.s32.totalorder %s10, 1
      %p74 = por %p72, %p73
      %p75 = scmp.ne.s32.totalorder %s67, %s70
      %p76 = scmp.eq.s32.totalorder %s10, 0
      %p77 = por %p75, %p76
      %p78 = scmp.ne.s32.totalorder %s67, %s70
      %p79 = scmp.eq.s32.totalorder %s15, 1
      %p80 = por %p78, %p79
      %p81 = scmp.ne.s32.totalorder %s70, %s71
      %p82 = scmp.eq.s32.totalorder %s15, 0
      %p83 = por %p81, %p82
      %p84 = scmp.ne.s32.totalorder %s70, %s71
      %p85 = scmp.eq.s32.totalorder %s16, 1
      %p86 = por %p84, %p85
      %p88 = scmp.ne.s32.totalorder %s71, %s87
      %p89 = scmp.eq.s32.totalorder %s16, 0
      %p90 = por %p88, %p89
      %s91 = ssub.s32 %s10, %s17
      %p92 = scmp.eq.s32.totalorder %s91, 0
      %s94 = sadd.s32 %s93, 1
      %s95 = scalar_select %p92, %s93, %s94
      %p98 = pneg %p92
      %p99 = scmp.eq.s32.totalorder %s10, 1
      %p100 = por %p98, %p99
      %p101 = scmp.ne.s32.totalorder %s93, %s96
      %p102 = scmp.eq.s32.totalorder %s10, 0
      %p103 = por %p101, %p102
      %p104 = scmp.ne.s32.totalorder %s93, %s96
      %p105 = scmp.eq.s32.totalorder %s15, 1
      %p106 = por %p104, %p105
      %p107 = scmp.ne.s32.totalorder %s96, %s97
      %p108 = scmp.eq.s32.totalorder %s15, 0
      %p109 = por %p107, %p108
      %p110 = scmp.ne.s32.totalorder %s96, %s97
      %p111 = scmp.eq.s32.totalorder %s16, 1
      %p112 = por %p110, %p111
      %p114 = scmp.ne.s32.totalorder %s97, %s113
      %p115 = scmp.eq.s32.totalorder %s16, 0
      %p116 = por %p114, %p115
      %p117 = scmp.le.s32.totalorder 1, %s10
      %p118 = scmp.lt.s32.totalorder %s10, 3
      %p119 = pnand %p117, %p118
      %p120 = pneg %p119
      // Predicated region
      $region9: #{geometric_controller_soa.1} parent=5 // pred_check
        _
      $region10: #{geometric_controller_soa.1} parent=5 // pred_check_branch
        %122 = sbr.rel (%p119) target = $region12
      $region11: #{geometric_controller_soa.1} parent=5 // pred_region
        %s123 = ssub.s32 %s10, 1
        // Predicated region
        $region13: #{geometric_controller_soa.1} parent=11 // pred_check
          %p124 = pneg %p31
        $region14: #{geometric_controller_soa.1} parent=11 // pred_check_branch
          %126 = sbr.rel (%p124) target = $region16
        $region15: #{geometric_controller_soa.1} parent=11 // pred_region
          %s128 = ssub.s32 16, 16
          %129 = vsyncadd [#allocation3], %s128
          %s131 = sshll.u32 %s0, 4
          %s132 = int_to_ptr.vmem [resolvable:$true] %s131
          %134 = dma.vmem_to_smem %s132, 16, [#allocation2], [#allocation3]
        $region16: #{geometric_controller_soa.1} parent=11 // pred_fallthru
          _
      $region12: #{geometric_controller_soa.1} parent=5 // pred_fallthru
        _
      %p135 = scmp.lt.s32.totalorder %s10, 2
      // Predicated region
      $region17: #{geometric_controller_soa.1} parent=5 // pred_check
        %p136 = pneg %p135
      $region18: #{geometric_controller_soa.1} parent=5 // pred_check_branch
        %138 = sbr.rel (%p136) target = $region20
      $region19: #{geometric_controller_soa.1} parent=5 // pred_region
        // Predicated region
        $region21: #{geometric_controller_soa.1} parent=19 // pred_check
          %p139 = pneg %p51
        $region22: #{geometric_controller_soa.1} parent=19 // pred_check_branch
          %141 = sbr.rel (%p139) target = $region24
        $region23: #{geometric_controller_soa.1} parent=19 // pred_region
          %s142 = sand.u32 %s41, 1
          %s143 = sand.u32 %s41, 1
          %s144 = smul.addr %s143, 104
          %s145 = scalar_lea.vmem [#allocation4], %s144
          %s146 = smul.addr %s10, 8
          %s147 = scalar_lea.vmem %s1, %s146
          // Predicated region
          $region25: #{geometric_controller_soa.1} parent=23 // pred_check
            _
          $region26: #{geometric_controller_soa.1} parent=23 // pred_check_branch
            %149 = sbr.rel (0) target = $region28
          $region27: #{geometric_controller_soa.1} parent=23 // pred_region
            // Predicated region
            $region29: #{geometric_controller_soa.1} parent=27 // pred_check
              _
            $region30: #{geometric_controller_soa.1} parent=27 // pred_check_branch
              %151 = sbr.rel (0) target = $region32
            $region31: #{geometric_controller_soa.1} parent=27 // pred_region
              // Predicated region
              $region44: #{geometric_controller_soa.1} parent=31 // pred_check
                _
              $region45: #{geometric_controller_soa.1} parent=31 // pred_check_branch
                %191 = sbr.rel (0) target = $region47
              $region46: #{geometric_controller_soa.1} parent=31 // pred_region
                loop: start=0, step=1, limit=1
                $region48: #{geometric_controller_soa.1} parent=46 // loop_pre_header
                  _
                $region49: #{geometric_controller_soa.1} parent=46 // loop_header
                  %s193 = sphi 0, %s197
                  %p194 = scmp.ge.s32.totalorder %s193, 1
                  %s198 = sphi %s147, %s147
                  %s199 = sphi %s145, %s145
                $region50: #{geometric_controller_soa.1} parent=46 // loop_header_branch
                  %196 = sbr.rel (%p194) target = $region54
                $region51: #{geometric_controller_soa.1} parent=46 // loop_body
                  %v200 = vld [vmem:[%s198] sm:$0xff]
                  %201 = vst [vmem:[%s199] sm:$0xff] %v200
                  %v202 = vld [vmem:[%s198 + $0x10] sm:$0xff]
                  %203 = vst [vmem:[%s199 + $0x8] sm:$0xff] %v202
                  %v204 = vld [vmem:[%s198 + $0x20] sm:$0xff]
                  %205 = vst [vmem:[%s199 + $0x10] sm:$0xff] %v204
                  %v206 = vld [vmem:[%s198 + $0x30] sm:$0xff]
                  %207 = vst [vmem:[%s199 + $0x18] sm:$0xff] %v206
                  %v208 = vld [vmem:[%s198 + $0x40] sm:$0xff]
                  %209 = vst [vmem:[%s199 + $0x20] sm:$0xff] %v208
                  %v210 = vld [vmem:[%s198 + $0x50] sm:$0xff]
                  %211 = vst [vmem:[%s199 + $0x28] sm:$0xff] %v210
                  %v212 = vld [vmem:[%s198 + $0x60] sm:$0xff]
                  %213 = vst [vmem:[%s199 + $0x30] sm:$0xff] %v212
                  %v214 = vld [vmem:[%s198 + $0x70] sm:$0xff]
                  %215 = vst [vmem:[%s199 + $0x38] sm:$0xff] %v214
                  %v216 = vld [vmem:[%s198 + $0x80] sm:$0xff]
                  %217 = vst [vmem:[%s199 + $0x40] sm:$0xff] %v216
                  %v218 = vld [vmem:[%s198 + $0x90] sm:$0xff]
                  %219 = vst [vmem:[%s199 + $0x48] sm:$0xff] %v218
                  %v220 = vld [vmem:[%s198 + $0xa0] sm:$0xff]
                  %221 = vst [vmem:[%s199 + $0x50] sm:$0xff] %v220
                  %v222 = vld [vmem:[%s198 + $0xb0] sm:$0xff]
                  %223 = vst [vmem:[%s199 + $0x58] sm:$0xff] %v222
                  %v224 = vld [vmem:[%s198 + $0xc0] sm:$0xff]
                  %225 = vst [vmem:[%s199 + $0x60] sm:$0xff] %v224
                $region52: #{geometric_controller_soa.1} parent=46 // loop_footer
                  %s197 = sadd.s32 1, %s193
                $region53: #{geometric_controller_soa.1} parent=46 // loop_footer_branch
                  %192 = sbr.rel target = $region49
                $region54: #{geometric_controller_soa.1} parent=46 // loop_exit
                  _
              $region47: #{geometric_controller_soa.1} parent=31 // pred_fallthru
                _
              // Predicated region
              $region55: #{geometric_controller_soa.1} parent=31 // pred_check
                _
              $region56: #{geometric_controller_soa.1} parent=31 // pred_check_branch
                %227 = sbr.rel target = $region58
              $region57: #{geometric_controller_soa.1} parent=31 // pred_region
                _
              $region58: #{geometric_controller_soa.1} parent=31 // pred_fallthru
                _
            $region32: #{geometric_controller_soa.1} parent=27 // pred_fallthru
              _
            // Predicated region
            $region33: #{geometric_controller_soa.1} parent=27 // pred_check
              _
            $region34: #{geometric_controller_soa.1} parent=27 // pred_check_branch
              %153 = sbr.rel target = $region36
            $region35: #{geometric_controller_soa.1} parent=27 // pred_region
              %s155 = ssub.s32 256, 1
              loop: start=0, step=1, limit=1
              $region37: #{geometric_controller_soa.1} parent=35 // loop_pre_header
                _
              $region38: #{geometric_controller_soa.1} parent=35 // loop_header
                %s157 = sphi 0, %s161
                %p158 = scmp.ge.s32.totalorder %s157, 1
                %s162 = sphi %s147, %s147
                %s163 = sphi %s145, %s145
              $region39: #{geometric_controller_soa.1} parent=35 // loop_header_branch
                %160 = sbr.rel (%p158) target = $region43
              $region40: #{geometric_controller_soa.1} parent=35 // loop_body
                %v164 = vld [vmem:[%s162] sm:%s155]
                %165 = vst [vmem:[%s163] sm:%s155] %v164
                %v166 = vld [vmem:[%s162 + $0x10] sm:%s155]
                %167 = vst [vmem:[%s163 + $0x8] sm:%s155] %v166
                %v168 = vld [vmem:[%s162 + $0x20] sm:%s155]
                %169 = vst [vmem:[%s163 + $0x10] sm:%s155] %v168
                %v170 = vld [vmem:[%s162 + $0x30] sm:%s155]
                %171 = vst [vmem:[%s163 + $0x18] sm:%s155] %v170
                %v172 = vld [vmem:[%s162 + $0x40] sm:%s155]
                %173 = vst [vmem:[%s163 + $0x20] sm:%s155] %v172
                %v174 = vld [vmem:[%s162 + $0x50] sm:%s155]
                %175 = vst [vmem:[%s163 + $0x28] sm:%s155] %v174
                %v176 = vld [vmem:[%s162 + $0x60] sm:%s155]
                %177 = vst [vmem:[%s163 + $0x30] sm:%s155] %v176
                %v178 = vld [vmem:[%s162 + $0x70] sm:%s155]
                %179 = vst [vmem:[%s163 + $0x38] sm:%s155] %v178
                %v180 = vld [vmem:[%s162 + $0x80] sm:%s155]
                %181 = vst [vmem:[%s163 + $0x40] sm:%s155] %v180
                %v182 = vld [vmem:[%s162 + $0x90] sm:%s155]
                %183 = vst [vmem:[%s163 + $0x48] sm:%s155] %v182
                %v184 = vld [vmem:[%s162 + $0xa0] sm:%s155]
                %185 = vst [vmem:[%s163 + $0x50] sm:%s155] %v184
                %v186 = vld [vmem:[%s162 + $0xb0] sm:%s155]
                %187 = vst [vmem:[%s163 + $0x58] sm:%s155] %v186
                %v188 = vld [vmem:[%s162 + $0xc0] sm:%s155]
                %189 = vst [vmem:[%s163 + $0x60] sm:%s155] %v188
              $region41: #{geometric_controller_soa.1} parent=35 // loop_footer
                %s161 = sadd.s32 1, %s157
              $region42: #{geometric_controller_soa.1} parent=35 // loop_footer_branch
                %156 = sbr.rel target = $region38
              $region43: #{geometric_controller_soa.1} parent=35 // loop_exit
                _
            $region36: #{geometric_controller_soa.1} parent=27 // pred_fallthru
              _
          $region28: #{geometric_controller_soa.1} parent=23 // pred_fallthru
            _
          %228 = vnop
        $region24: #{geometric_controller_soa.1} parent=19 // pred_fallthru
          _
        // Predicated region
        $region59: #{geometric_controller_soa.1} parent=19 // pred_check
          %p229 = pneg %p77
        $region60: #{geometric_controller_soa.1} parent=19 // pred_check_branch
          %231 = sbr.rel (%p229) target = $region62
        $region61: #{geometric_controller_soa.1} parent=19 // pred_region
          %s232 = sand.u32 %s67, 1
          %s233 = sand.u32 %s67, 1
          %s234 = smul.addr %s233, 192
          %s235 = scalar_lea.vmem [#allocation5], %s234
          %s236 = smul.addr %s10, 8
          %s237 = scalar_lea.vmem %s2, %s236
          // Predicated region
          $region63: #{geometric_controller_soa.1} parent=61 // pred_check
            _
          $region64: #{geometric_controller_soa.1} parent=61 // pred_check_branch
            %239 = sbr.rel (0) target = $region66
          $region65: #{geometric_controller_soa.1} parent=61 // pred_region
            // Predicated region
            $region67: #{geometric_controller_soa.1} parent=65 // pred_check
              _
            $region68: #{geometric_controller_soa.1} parent=65 // pred_check_branch
              %241 = sbr.rel (0) target = $region70
            $region69: #{geometric_controller_soa.1} parent=65 // pred_region
              // Predicated region
              $region82: #{geometric_controller_soa.1} parent=69 // pred_check
                _
              $region83: #{geometric_controller_soa.1} parent=69 // pred_check_branch
                %303 = sbr.rel (0) target = $region85
              $region84: #{geometric_controller_soa.1} parent=69 // pred_region
                loop: start=0, step=1, limit=1
                $region86: #{geometric_controller_soa.1} parent=84 // loop_pre_header
                  _
                $region87: #{geometric_controller_soa.1} parent=84 // loop_header
                  %s305 = sphi 0, %s309
                  %p306 = scmp.ge.s32.totalorder %s305, 1
                  %s310 = sphi %s237, %s237
                  %s311 = sphi %s235, %s235
                $region88: #{geometric_controller_soa.1} parent=84 // loop_header_branch
                  %308 = sbr.rel (%p306) target = $region92
                $region89: #{geometric_controller_soa.1} parent=84 // loop_body
                  %v312 = vld [vmem:[%s310] sm:$0xff]
                  %313 = vst [vmem:[%s311] sm:$0xff] %v312
                  %v314 = vld [vmem:[%s310 + $0x10] sm:$0xff]
                  %315 = vst [vmem:[%s311 + $0x8] sm:$0xff] %v314
                  %v316 = vld [vmem:[%s310 + $0x20] sm:$0xff]
                  %317 = vst [vmem:[%s311 + $0x10] sm:$0xff] %v316
                  %v318 = vld [vmem:[%s310 + $0x30] sm:$0xff]
                  %319 = vst [vmem:[%s311 + $0x18] sm:$0xff] %v318
                  %v320 = vld [vmem:[%s310 + $0x40] sm:$0xff]
                  %321 = vst [vmem:[%s311 + $0x20] sm:$0xff] %v320
                  %v322 = vld [vmem:[%s310 + $0x50] sm:$0xff]
                  %323 = vst [vmem:[%s311 + $0x28] sm:$0xff] %v322
                  %v324 = vld [vmem:[%s310 + $0x60] sm:$0xff]
                  %325 = vst [vmem:[%s311 + $0x30] sm:$0xff] %v324
                  %v326 = vld [vmem:[%s310 + $0x70] sm:$0xff]
                  %327 = vst [vmem:[%s311 + $0x38] sm:$0xff] %v326
                  %v328 = vld [vmem:[%s310 + $0x80] sm:$0xff]
                  %329 = vst [vmem:[%s311 + $0x40] sm:$0xff] %v328
                  %v330 = vld [vmem:[%s310 + $0x90] sm:$0xff]
                  %331 = vst [vmem:[%s311 + $0x48] sm:$0xff] %v330
                  %v332 = vld [vmem:[%s310 + $0xa0] sm:$0xff]
                  %333 = vst [vmem:[%s311 + $0x50] sm:$0xff] %v332
                  %v334 = vld [vmem:[%s310 + $0xb0] sm:$0xff]
                  %335 = vst [vmem:[%s311 + $0x58] sm:$0xff] %v334
                  %v336 = vld [vmem:[%s310 + $0xc0] sm:$0xff]
                  %337 = vst [vmem:[%s311 + $0x60] sm:$0xff] %v336
                  %v338 = vld [vmem:[%s310 + $0xd0] sm:$0xff]
                  %339 = vst [vmem:[%s311 + $0x68] sm:$0xff] %v338
                  %v340 = vld [vmem:[%s310 + $0xe0] sm:$0xff]
                  %341 = vst [vmem:[%s311 + $0x70] sm:$0xff] %v340
                  %v342 = vld [vmem:[%s310 + $0xf0] sm:$0xff]
                  %343 = vst [vmem:[%s311 + $0x78] sm:$0xff] %v342
                  %v344 = vld [vmem:[%s310 + $0x100] sm:$0xff]
                  %345 = vst [vmem:[%s311 + $0x80] sm:$0xff] %v344
                  %v346 = vld [vmem:[%s310 + $0x110] sm:$0xff]
                  %347 = vst [vmem:[%s311 + $0x88] sm:$0xff] %v346
                  %v348 = vld [vmem:[%s310 + $0x120] sm:$0xff]
                  %349 = vst [vmem:[%s311 + $0x90] sm:$0xff] %v348
                  %v350 = vld [vmem:[%s310 + $0x130] sm:$0xff]
                  %351 = vst [vmem:[%s311 + $0x98] sm:$0xff] %v350
                  %v352 = vld [vmem:[%s310 + $0x140] sm:$0xff]
                  %353 = vst [vmem:[%s311 + $0xa0] sm:$0xff] %v352
                  %v354 = vld [vmem:[%s310 + $0x150] sm:$0xff]
                  %355 = vst [vmem:[%s311 + $0xa8] sm:$0xff] %v354
                  %v356 = vld [vmem:[%s310 + $0x160] sm:$0xff]
                  %357 = vst [vmem:[%s311 + $0xb0] sm:$0xff] %v356
                  %v358 = vld [vmem:[%s310 + $0x170] sm:$0xff]
                  %359 = vst [vmem:[%s311 + $0xb8] sm:$0xff] %v358
                $region90: #{geometric_controller_soa.1} parent=84 // loop_footer
                  %s309 = sadd.s32 1, %s305
                $region91: #{geometric_controller_soa.1} parent=84 // loop_footer_branch
                  %304 = sbr.rel target = $region87
                $region92: #{geometric_controller_soa.1} parent=84 // loop_exit
                  _
              $region85: #{geometric_controller_soa.1} parent=69 // pred_fallthru
                _
              // Predicated region
              $region93: #{geometric_controller_soa.1} parent=69 // pred_check
                _
              $region94: #{geometric_controller_soa.1} parent=69 // pred_check_branch
                %361 = sbr.rel target = $region96
              $region95: #{geometric_controller_soa.1} parent=69 // pred_region
                _
              $region96: #{geometric_controller_soa.1} parent=69 // pred_fallthru
                _
            $region70: #{geometric_controller_soa.1} parent=65 // pred_fallthru
              _
            // Predicated region
            $region71: #{geometric_controller_soa.1} parent=65 // pred_check
              _
            $region72: #{geometric_controller_soa.1} parent=65 // pred_check_branch
              %243 = sbr.rel target = $region74
            $region73: #{geometric_controller_soa.1} parent=65 // pred_region
              %s245 = ssub.s32 256, 1
              loop: start=0, step=1, limit=1
              $region75: #{geometric_controller_soa.1} parent=73 // loop_pre_header
                _
              $region76: #{geometric_controller_soa.1} parent=73 // loop_header
                %s247 = sphi 0, %s251
                %p248 = scmp.ge.s32.totalorder %s247, 1
                %s252 = sphi %s237, %s237
                %s253 = sphi %s235, %s235
              $region77: #{geometric_controller_soa.1} parent=73 // loop_header_branch
                %250 = sbr.rel (%p248) target = $region81
              $region78: #{geometric_controller_soa.1} parent=73 // loop_body
                %v254 = vld [vmem:[%s252] sm:%s245]
                %255 = vst [vmem:[%s253] sm:%s245] %v254
                %v256 = vld [vmem:[%s252 + $0x10] sm:%s245]
                %257 = vst [vmem:[%s253 + $0x8] sm:%s245] %v256
                %v258 = vld [vmem:[%s252 + $0x20] sm:%s245]
                %259 = vst [vmem:[%s253 + $0x10] sm:%s245] %v258
                %v260 = vld [vmem:[%s252 + $0x30] sm:%s245]
                %261 = vst [vmem:[%s253 + $0x18] sm:%s245] %v260
                %v262 = vld [vmem:[%s252 + $0x40] sm:%s245]
                %263 = vst [vmem:[%s253 + $0x20] sm:%s245] %v262
                %v264 = vld [vmem:[%s252 + $0x50] sm:%s245]
                %265 = vst [vmem:[%s253 + $0x28] sm:%s245] %v264
                %v266 = vld [vmem:[%s252 + $0x60] sm:%s245]
                %267 = vst [vmem:[%s253 + $0x30] sm:%s245] %v266
                %v268 = vld [vmem:[%s252 + $0x70] sm:%s245]
                %269 = vst [vmem:[%s253 + $0x38] sm:%s245] %v268
                %v270 = vld [vmem:[%s252 + $0x80] sm:%s245]
                %271 = vst [vmem:[%s253 + $0x40] sm:%s245] %v270
                %v272 = vld [vmem:[%s252 + $0x90] sm:%s245]
                %273 = vst [vmem:[%s253 + $0x48] sm:%s245] %v272
                %v274 = vld [vmem:[%s252 + $0xa0] sm:%s245]
                %275 = vst [vmem:[%s253 + $0x50] sm:%s245] %v274
                %v276 = vld [vmem:[%s252 + $0xb0] sm:%s245]
                %277 = vst [vmem:[%s253 + $0x58] sm:%s245] %v276
                %v278 = vld [vmem:[%s252 + $0xc0] sm:%s245]
                %279 = vst [vmem:[%s253 + $0x60] sm:%s245] %v278
                %v280 = vld [vmem:[%s252 + $0xd0] sm:%s245]
                %281 = vst [vmem:[%s253 + $0x68] sm:%s245] %v280
                %v282 = vld [vmem:[%s252 + $0xe0] sm:%s245]
                %283 = vst [vmem:[%s253 + $0x70] sm:%s245] %v282
                %v284 = vld [vmem:[%s252 + $0xf0] sm:%s245]
                %285 = vst [vmem:[%s253 + $0x78] sm:%s245] %v284
                %v286 = vld [vmem:[%s252 + $0x100] sm:%s245]
                %287 = vst [vmem:[%s253 + $0x80] sm:%s245] %v286
                %v288 = vld [vmem:[%s252 + $0x110] sm:%s245]
                %289 = vst [vmem:[%s253 + $0x88] sm:%s245] %v288
                %v290 = vld [vmem:[%s252 + $0x120] sm:%s245]
                %291 = vst [vmem:[%s253 + $0x90] sm:%s245] %v290
                %v292 = vld [vmem:[%s252 + $0x130] sm:%s245]
                %293 = vst [vmem:[%s253 + $0x98] sm:%s245] %v292
                %v294 = vld [vmem:[%s252 + $0x140] sm:%s245]
                %295 = vst [vmem:[%s253 + $0xa0] sm:%s245] %v294
                %v296 = vld [vmem:[%s252 + $0x150] sm:%s245]
                %297 = vst [vmem:[%s253 + $0xa8] sm:%s245] %v296
                %v298 = vld [vmem:[%s252 + $0x160] sm:%s245]
                %299 = vst [vmem:[%s253 + $0xb0] sm:%s245] %v298
                %v300 = vld [vmem:[%s252 + $0x170] sm:%s245]
                %301 = vst [vmem:[%s253 + $0xb8] sm:%s245] %v300
              $region79: #{geometric_controller_soa.1} parent=73 // loop_footer
                %s251 = sadd.s32 1, %s247
              $region80: #{geometric_controller_soa.1} parent=73 // loop_footer_branch
                %246 = sbr.rel target = $region76
              $region81: #{geometric_controller_soa.1} parent=73 // loop_exit
                _
            $region74: #{geometric_controller_soa.1} parent=65 // pred_fallthru
              _
          $region66: #{geometric_controller_soa.1} parent=61 // pred_fallthru
            _
          %362 = vnop
        $region62: #{geometric_controller_soa.1} parent=19 // pred_fallthru
          _
      $region20: #{geometric_controller_soa.1} parent=5 // pred_fallthru
        _
      %p363 = scmp.le.s32.totalorder 1, %s10
      %p364 = scmp.lt.s32.totalorder %s10, 3
      %p365 = pnand %p363, %p364
      %p366 = pneg %p365
      // Predicated region
      $region97: #{geometric_controller_soa.1} parent=5 // pred_check
        _
      $region98: #{geometric_controller_soa.1} parent=5 // pred_check_branch
        %368 = sbr.rel (%p365) target = $region100
      $region99: #{geometric_controller_soa.1} parent=5 // pred_region
        %s369 = ssub.s32 %s10, 1
        // Predicated region
        $region101: #{geometric_controller_soa.1} parent=99 // pred_check
          %p370 = pneg %p31
        $region102: #{geometric_controller_soa.1} parent=99 // pred_check_branch
          %372 = sbr.rel (%p370) target = $region104
        $region103: #{geometric_controller_soa.1} parent=99 // pred_region
          %373 = dma.done [#allocation3], 16
        $region104: #{geometric_controller_soa.1} parent=99 // pred_fallthru
          _
        %s374 = sand.u32 %s44, 1
        %s375 = sand.u32 %s44, 1
        %s376 = smul.addr %s375, 104
        %s377 = scalar_lea.vmem [#allocation4], %s376
        // Predicated region
        $region105: #{geometric_controller_soa.1} parent=99 // pred_check
          %p378 = pneg %p57
        $region106: #{geometric_controller_soa.1} parent=99 // pred_check_branch
          %380 = sbr.rel (%p378) target = $region108
        $region107: #{geometric_controller_soa.1} parent=99 // pred_region
          _
        $region108: #{geometric_controller_soa.1} parent=99 // pred_fallthru
          _
        %s381 = sand.u32 %s70, 1
        %s382 = sand.u32 %s70, 1
        %s383 = smul.addr %s382, 192
        %s384 = scalar_lea.vmem [#allocation5], %s383
        // Predicated region
        $region109: #{geometric_controller_soa.1} parent=99 // pred_check
          %p385 = pneg %p83
        $region110: #{geometric_controller_soa.1} parent=99 // pred_check_branch
          %387 = sbr.rel (%p385) target = $region112
        $region111: #{geometric_controller_soa.1} parent=99 // pred_region
          _
        $region112: #{geometric_controller_soa.1} parent=99 // pred_fallthru
          _
        %388 = sfence
        %p389 = pneg %p31
        %p390 = pneg %p28
        %s391 = sand.u32 %s44, 1
        %s392 = sand.u32 %s44, 1
        %s393 = smul.addr %s392, 104
        %s394 = scalar_lea.vmem [#allocation4], %s393
        %p395 = pneg %p57
        %p396 = pneg %p54
        %s397 = sand.u32 %s70, 1
        %s398 = sand.u32 %s70, 1
        %s399 = smul.addr %s398, 192
        %s400 = scalar_lea.vmem [#allocation5], %s399
        %p401 = pneg %p83
        %p402 = pneg %p80
        %p403 = pneg %p109
        %p404 = pneg %p106
        %s405 = sand.u32 %s96, 1
        %s406 = sand.u32 %s96, 1
        %s407 = smul.addr %s406, 32
        %s408 = scalar_lea.vmem [#allocation6], %s407
        %s409 = sld [smem:[#allocation2]]
        %s410 = sld [smem:[#allocation2 + $0x1]]
        %s411 = sld [smem:[#allocation2 + $0x2]]
        %s412 = sld [smem:[#allocation2 + $0x3]]
        %s413 = sld [smem:[#allocation2 + $0x4]]
        %s414 = sld [smem:[#allocation2 + $0x5]]
        %s415 = sld [smem:[#allocation2 + $0x6]]
        %s416 = sld [smem:[#allocation2 + $0x7]]
        %s417 = sld [smem:[#allocation2 + $0x8]]
        %s418 = sld [smem:[#allocation2 + $0x9]]
        %s419 = sld [smem:[#allocation2 + $0xa]]
        %s420 = sld [smem:[#allocation2 + $0xb]]
        %s421 = sld [smem:[#allocation2 + $0xc]]
        %s422 = sld [smem:[#allocation2 + $0xd]]
        %s423 = sld [smem:[#allocation2 + $0xe]]
        %s424 = sld [smem:[#allocation2 + $0xf]]
        %v425 = vld [vmem:[%s377] sm:$0xff]
        %s426 = scalar_lea.vmem %s377, 8 [#allocation4]
        %v427 = vld [vmem:[%s426] sm:$0xff]
        %s428 = scalar_lea.vmem %s377, 16 [#allocation4]
        %v429 = vld [vmem:[%s428] sm:$0xff]
        %s430 = scalar_lea.vmem %s377, 24 [#allocation4]
        %v431 = vld [vmem:[%s430] sm:$0xff]
        %s432 = scalar_lea.vmem %s377, 32 [#allocation4]
        %v433 = vld [vmem:[%s432] sm:$0xff]
        %s434 = scalar_lea.vmem %s377, 40 [#allocation4]
        %v435 = vld [vmem:[%s434] sm:$0xff]
        %s436 = scalar_lea.vmem %s377, 48 [#allocation4]
        %v437 = vld [vmem:[%s436] sm:$0xff]
        %s438 = scalar_lea.vmem %s377, 56 [#allocation4]
        %v439 = vld [vmem:[%s438] sm:$0xff]
        %s440 = scalar_lea.vmem %s377, 64 [#allocation4]
        %v441 = vld [vmem:[%s440] sm:$0xff]
        %s442 = scalar_lea.vmem %s377, 72 [#allocation4]
        %v443 = vld [vmem:[%s442] sm:$0xff]
        %s444 = scalar_lea.vmem %s377, 80 [#allocation4]
        %v445 = vld [vmem:[%s444] sm:$0xff]
        %s446 = scalar_lea.vmem %s377, 88 [#allocation4]
        %v447 = vld [vmem:[%s446] sm:$0xff]
        %s448 = scalar_lea.vmem %s377, 96 [#allocation4]
        %v449 = vld [vmem:[%s448] sm:$0xff]
        %v450 = vld [vmem:[%s384] sm:$0xff]
        %s451 = scalar_lea.vmem %s384, 8 [#allocation5]
        %v452 = vld [vmem:[%s451] sm:$0xff]
        %s453 = scalar_lea.vmem %s384, 16 [#allocation5]
        %v454 = vld [vmem:[%s453] sm:$0xff]
        %s455 = scalar_lea.vmem %s384, 24 [#allocation5]
        %v456 = vld [vmem:[%s455] sm:$0xff]
        %s457 = scalar_lea.vmem %s384, 32 [#allocation5]
        %v458 = vld [vmem:[%s457] sm:$0xff]
        %s459 = scalar_lea.vmem %s384, 40 [#allocation5]
        %v460 = vld [vmem:[%s459] sm:$0xff]
        %s461 = scalar_lea.vmem %s384, 48 [#allocation5]
        %v462 = vld [vmem:[%s461] sm:$0xff]
        %s463 = scalar_lea.vmem %s384, 56 [#allocation5]
        %v464 = vld [vmem:[%s463] sm:$0xff]
        %s465 = scalar_lea.vmem %s384, 64 [#allocation5]
        %v466 = vld [vmem:[%s465] sm:$0xff]
        %s467 = scalar_lea.vmem %s384, 72 [#allocation5]
        %v468 = vld [vmem:[%s467] sm:$0xff]
        %s469 = scalar_lea.vmem %s384, 80 [#allocation5]
        %v470 = vld [vmem:[%s469] sm:$0xff]
        %s471 = scalar_lea.vmem %s384, 88 [#allocation5]
        %v472 = vld [vmem:[%s471] sm:$0xff]
        %s473 = scalar_lea.vmem %s384, 96 [#allocation5]
        %v474 = vld [vmem:[%s473] sm:$0xff]
        %s475 = scalar_lea.vmem %s384, 104 [#allocation5]
        %v476 = vld [vmem:[%s475] sm:$0xff]
        %s477 = scalar_lea.vmem %s384, 112 [#allocation5]
        %v478 = vld [vmem:[%s477] sm:$0xff]
        %s479 = scalar_lea.vmem %s384, 120 [#allocation5]
        %v480 = vld [vmem:[%s479] sm:$0xff]
        %s481 = scalar_lea.vmem %s384, 128 [#allocation5]
        %v482 = vld [vmem:[%s481] sm:$0xff]
        %s483 = scalar_lea.vmem %s384, 136 [#allocation5]
        %v484 = vld [vmem:[%s483] sm:$0xff]
        %s485 = scalar_lea.vmem %s384, 144 [#allocation5]
        %v486 = vld [vmem:[%s485] sm:$0xff]
        %s487 = scalar_lea.vmem %s384, 152 [#allocation5]
        %v488 = vld [vmem:[%s487] sm:$0xff]
        %s489 = scalar_lea.vmem %s384, 160 [#allocation5]
        %v490 = vld [vmem:[%s489] sm:$0xff]
        %s491 = scalar_lea.vmem %s384, 168 [#allocation5]
        %v492 = vld [vmem:[%s491] sm:$0xff]
        %s493 = scalar_lea.vmem %s384, 176 [#allocation5]
        %v494 = vld [vmem:[%s493] sm:$0xff]
        %s495 = scalar_lea.vmem %s384, 184 [#allocation5]
        %v496 = vld [vmem:[%s495] sm:$0xff]
        %v497 = vmul.f32 %v431, %v431
        %v498 = vmul.f32 %v433, %v433
        %v499 = vmul.f32 %v435, %v435
        %v500 = vmul.f32 %v431, %v433
        %v501 = vmul.f32 %v431, %v435
        %v502 = vmul.f32 %v433, %v435
        %v503 = vmul.f32 %v437, %v431
        %v504 = vmul.f32 %v437, %v433
        %v505 = vmul.f32 %v437, %v435
        %v506 = vadd.f32 %v498, %v499
        %v507 = vmul.f32 %v506, 2.0
        %v508 = vsub.f32 1.0, %v507
        %v509 = vadd.f32 %v500, %v505
        %v510 = vmul.f32 %v509, 2.0
        %v511 = vsub.f32 %v501, %v504
        %v512 = vmul.f32 %v511, 2.0
        %v513 = vsub.f32 %v500, %v505
        %v514 = vmul.f32 %v513, 2.0
        %v515 = vadd.f32 %v497, %v499
        %v516 = vmul.f32 %v515, 2.0
        %v517 = vsub.f32 1.0, %v516
        %v518 = vadd.f32 %v502, %v503
        %v519 = vmul.f32 %v518, 2.0
        %v520 = vadd.f32 %v501, %v504
        %v521 = vmul.f32 %v520, 2.0
        %v522 = vsub.f32 %v502, %v503
        %v523 = vmul.f32 %v522, 2.0
        %v524 = vadd.f32 %v497, %v498
        %v525 = vmul.f32 %v524, 2.0
        %v526 = vsub.f32 1.0, %v525
        %v527 = vsub.f32 %v425, %v450
        %v528 = vsub.f32 %v427, %v452
        %v529 = vsub.f32 %v429, %v454
        %v530 = vsub.f32 %v439, %v456
        %v531 = vsub.f32 %v441, %v458
        %v532 = vsub.f32 %v443, %v460
        %v533 = vstv %s409
        %v534 = vmul.f32 %v533, %v527
        %v535 = vmul.f32 %v533, %v528
        %v536 = vmul.f32 %v533, %v529
        %v537 = vstv %s410
        %v538 = vmul.f32 %v537, %v530
        %v539 = vmul.f32 %v537, %v531
        %v540 = vmul.f32 %v537, %v532
        %v541 = vadd.f32 %v534, 0.0
        %v542 = vadd.f32 %v541, %v538
        %v543 = vadd.f32 %v535, 0.0
        %v544 = vadd.f32 %v543, %v539
        %v545 = vadd.f32 %v536, 0.0
        %v546 = vadd.f32 %v545, %v540
        %v547 = vsub.f32 0.0, %v542
        %v548 = vstv %s413
        %v549 = vmul.f32 %v548, %v462
        %v550 = vadd.f32 %v547, %v549
        %v551 = vsub.f32 0.0, %v544
        %v552 = vmul.f32 %v548, %v464
        %v553 = vadd.f32 %v551, %v552
        %v554 = vsub.f32 0.0, %v546
        %v555 = vstv %s414
        %v556 = vsub.f32 %v466, %v555
        %v557 = vmul.f32 %v548, %v556
        %v558 = vadd.f32 %v554, %v557
        %v559 = vmul.f32 %v550, %v521
        %v560 = vmul.f32 %v553, %v523
        %v561 = vadd.f32 %v559, %v560
        %v562 = vmul.f32 %v558, %v526
        %v563 = vadd.f32 %v561, %v562
        %v564 = vsub.f32 0.0, %v563
        %v565 = vstv %s415
        %v566 = vmul.f32 %v564, %v565
        %v567 = vsub.f32 0.0, %v566
        %v568 = vmul.f32 %v567, %v521
        %v569 = vsub.f32 %v568, %v462
        %v570 = vmul.f32 %v567, %v523
        %v571 = vsub.f32 %v570, %v464
        %v572 = vmul.f32 %v566, %v526
        %v573 = vsub.f32 %v555, %v572
        %v574 = vsub.f32 %v573, %v466
        %s575 = ssub.f32 0.0, %s409
        %v576 = vstv %s575
        %v577 = vmul.f32 %v576, %v530
        %v578 = vmul.f32 %v537, %v569
        %v579 = vsub.f32 %v577, %v578
        %v580 = vmul.f32 %v548, %v468
        %v581 = vadd.f32 %v579, %v580
        %v582 = vmul.f32 %v576, %v531
        %v583 = vmul.f32 %v537, %v571
        %v584 = vsub.f32 %v582, %v583
        %v585 = vmul.f32 %v548, %v470
        %v586 = vadd.f32 %v584, %v585
        %v587 = vmul.f32 %v576, %v532
        %v588 = vmul.f32 %v537, %v574
        %v589 = vsub.f32 %v587, %v588
        %v590 = vmul.f32 %v548, %v472
        %v591 = vadd.f32 %v589, %v590
        %v592 = vmul.f32 %v447, %v508
        %v593 = vmul.f32 %v447, %v510
        %v594 = vmul.f32 %v447, %v512
        %v595 = vmul.f32 %v445, %v514
        %v596 = vmul.f32 %v445, %v517
        %v597 = vmul.f32 %v445, %v519
        %v598 = vsub.f32 %v592, %v595
        %v599 = vsub.f32 %v593, %v596
        %v600 = vsub.f32 %v594, %v597
        %v601 = vmul.f32 %v581, %v521
        %v602 = vmul.f32 %v586, %v523
        %v603 = vadd.f32 %v601, %v602
        %v604 = vmul.f32 %v591, %v526
        %v605 = vadd.f32 %v603, %v604
        %v606 = vsub.f32 0.0, %v605
        %v607 = vmul.f32 %v550, %v598
        %v608 = vmul.f32 %v553, %v599
        %v609 = vadd.f32 %v607, %v608
        %v610 = vmul.f32 %v558, %v600
        %v611 = vadd.f32 %v609, %v610
        %v612 = vsub.f32 %v606, %v611
        %v613 = vmul.f32 %v612, %v565
        %v614 = vsub.f32 0.0, %v613
        %v615 = vmul.f32 %v614, %v521
        %v616 = vmul.f32 %v566, %v598
        %v617 = vsub.f32 %v615, %v616
        %v618 = vsub.f32 %v617, %v468
        %v619 = vmul.f32 %v614, %v523
        %v620 = vmul.f32 %v566, %v599
        %v621 = vsub.f32 %v619, %v620
        %v622 = vsub.f32 %v621, %v470
        %v623 = vmul.f32 %v614, %v526
        %v624 = vmul.f32 %v566, %v600
        %v625 = vsub.f32 %v623, %v624
        %v626 = vsub.f32 %v625, %v472
        %v627 = vmul.f32 %v576, %v569
        %v628 = vmul.f32 %v537, %v618
        %v629 = vsub.f32 %v627, %v628
        %v630 = vmul.f32 %v548, %v474
        %v631 = vadd.f32 %v629, %v630
        %v632 = vmul.f32 %v576, %v571
        %v633 = vmul.f32 %v537, %v622
        %v634 = vsub.f32 %v632, %v633
        %v635 = vmul.f32 %v548, %v476
        %v636 = vadd.f32 %v634, %v635
        %v637 = vmul.f32 %v576, %v574
        %v638 = vmul.f32 %v537, %v626
        %v639 = vsub.f32 %v637, %v638
        %v640 = vmul.f32 %v548, %v478
        %v641 = vadd.f32 %v639, %v640
        %v642 = vmul.f32 %v550, %v550
        %v643 = vmul.f32 %v553, %v553
        %v644 = vadd.f32 %v642, %v643
        %v645 = vmul.f32 %v558, %v558
        %v646 = vadd.f32 %v644, %v645
        %v647 = vrsqrt.pop %v646
        %v648 = vsub.f32 0.0, %v647
        %v649 = vmul.f32 %v648, %v550
        %v650 = vmul.f32 %v648, %v553
        %v651 = vmul.f32 %v648, %v558
        %v652 = vmul.f32 %v581, %v581
        %v653 = vmul.f32 %v586, %v586
        %v654 = vadd.f32 %v652, %v653
        %v655 = vmul.f32 %v591, %v591
        %v656 = vadd.f32 %v654, %v655
        %v657 = vrsqrt.pop %v656
        %v658 = vsub.f32 0.0, %v657
        %v659 = vmul.f32 %v658, %v581
        %v660 = vmul.f32 %v658, %v586
        %v661 = vmul.f32 %v658, %v591
        %v662 = vmul.f32 %v631, %v631
        %v663 = vmul.f32 %v636, %v636
        %v664 = vadd.f32 %v662, %v663
        %v665 = vmul.f32 %v641, %v641
        %v666 = vadd.f32 %v664, %v665
        %v667 = vrsqrt.pop %v666
        %v668 = vsub.f32 0.0, %v667
        %v669 = vmul.f32 %v668, %v631
        %v670 = vmul.f32 %v668, %v636
        %v671 = vmul.f32 %v668, %v641
        %v672 = vmul.f32 %v650, %v484
        %v673 = vmul.f32 %v651, %v482
        %v674 = vsub.f32 %v672, %v673
        %v675 = vmul.f32 %v651, %v480
        %v676 = vmul.f32 %v649, %v484
        %v677 = vsub.f32 %v675, %v676
        %v678 = vmul.f32 %v649, %v482
        %v679 = vmul.f32 %v650, %v480
        %v680 = vsub.f32 %v678, %v679
        %v681 = vmul.f32 %v660, %v484
        %v682 = vmul.f32 %v661, %v482
        %v683 = vsub.f32 %v681, %v682
        %v684 = vmul.f32 %v661, %v480
        %v685 = vmul.f32 %v659, %v484
        %v686 = vsub.f32 %v684, %v685
        %v687 = vmul.f32 %v659, %v482
        %v688 = vmul.f32 %v660, %v480
        %v689 = vsub.f32 %v687, %v688
        %v690 = vmul.f32 %v650, %v490
        %v691 = vmul.f32 %v651, %v488
        %v692 = vsub.f32 %v690, %v691
        %v693 = vmul.f32 %v651, %v486
        %v694 = vmul.f32 %v649, %v490
        %v695 = vsub.f32 %v693, %v694
        %v696 = vmul.f32 %v649, %v488
        %v697 = vmul.f32 %v650, %v486
        %v698 = vsub.f32 %v696, %v697
        %v699 = vadd.f32 %v683, 0.0
        %v700 = vadd.f32 %v699, %v692
        %v701 = vadd.f32 %v686, 0.0
        %v702 = vadd.f32 %v701, %v695
        %v703 = vadd.f32 %v689, 0.0
        %v704 = vadd.f32 %v703, %v698
        %v705 = vmul.f32 %v670, %v484
        %v706 = vmul.f32 %v671, %v482
        %v707 = vsub.f32 %v705, %v706
        %v708 = vmul.f32 %v671, %v480
        %v709 = vmul.f32 %v669, %v484
        %v710 = vsub.f32 %v708, %v709
        %v711 = vmul.f32 %v669, %v482
        %v712 = vmul.f32 %v670, %v480
        %v713 = vsub.f32 %v711, %v712
        %v714 = vmul.f32 %v660, %v490
        %v715 = vmul.f32 %v661, %v488
        %v716 = vsub.f32 %v714, %v715
        %v717 = vmul.f32 %v661, %v486
        %v718 = vmul.f32 %v659, %v490
        %v719 = vsub.f32 %v717, %v718
        %v720 = vmul.f32 %v659, %v488
        %v721 = vmul.f32 %v660, %v486
        %v722 = vsub.f32 %v720, %v721
        %v723 = vmul.f32 %v716, 2.0
        %v724 = vmul.f32 %v719, 2.0
        %v725 = vmul.f32 %v722, 2.0
        %v726 = vmul.f32 %v650, %v496
        %v727 = vmul.f32 %v651, %v494
        %v728 = vsub.f32 %v726, %v727
        %v729 = vmul.f32 %v651, %v492
        %v730 = vmul.f32 %v649, %v496
        %v731 = vsub.f32 %v729, %v730
        %v732 = vmul.f32 %v649, %v494
        %v733 = vmul.f32 %v650, %v492
        %v734 = vsub.f32 %v732, %v733
        %v735 = vadd.f32 %v707, 0.0
        %v736 = vadd.f32 %v735, %v723
        %v737 = vadd.f32 %v736, %v728
        %v738 = vadd.f32 %v710, 0.0
        %v739 = vadd.f32 %v738, %v724
        %v740 = vadd.f32 %v739, %v731
        %v741 = vadd.f32 %v713, 0.0
        %v742 = vadd.f32 %v741, %v725
        %v743 = vadd.f32 %v742, %v734
        %v744 = vmul.f32 %v674, %v674
        %v745 = vmul.f32 %v677, %v677
        %v746 = vadd.f32 %v744, %v745
        %v747 = vmul.f32 %v680, %v680
        %v748 = vadd.f32 %v746, %v747
        %v749 = vrsqrt.pop %v748
        %v750 = vmul.f32 %v700, %v700
        %v751 = vmul.f32 %v702, %v702
        %v752 = vadd.f32 %v750, %v751
        %v753 = vmul.f32 %v704, %v704
        %v754 = vadd.f32 %v752, %v753
        %v755 = vrsqrt.pop %v754
        %v756 = vmul.f32 %v737, %v737
        %v757 = vmul.f32 %v740, %v740
        %v758 = vadd.f32 %v756, %v757
        %v759 = vmul.f32 %v743, %v743
        %v760 = vadd.f32 %v758, %v759
        %v761 = vrsqrt.pop %v760
        %v762 = vmul.f32 %v749, %v674
        %v763 = vmul.f32 %v749, %v677
        %v764 = vmul.f32 %v749, %v680
        %v765 = vmul.f32 %v755, %v762
        %v766 = vmul.f32 %v755, %v763
        %v767 = vmul.f32 %v755, %v764
        %v768 = vmul.f32 %v761, %v762
        %v769 = vmul.f32 %v761, %v763
        %v770 = vmul.f32 %v761, %v764
        %v771 = vmul.f32 %v763, %v651
        %v772 = vmul.f32 %v764, %v650
        %v773 = vsub.f32 %v771, %v772
        %v774 = vmul.f32 %v764, %v649
        %v775 = vmul.f32 %v762, %v651
        %v776 = vsub.f32 %v774, %v775
        %v777 = vmul.f32 %v762, %v650
        %v778 = vmul.f32 %v763, %v649
        %v779 = vsub.f32 %v777, %v778
        %v780 = vmul.f32 %v762, %v762
        %v781 = vmul.f32 %v763, %v763
        %v782 = vadd.f32 %v780, %v781
        %v783 = vmul.f32 %v764, %v764
        %v784 = vadd.f32 %v782, %v783
        %v785 = vrsqrt.pop %v784
        %v786 = vmul.f32 %v785, %v762
        %v787 = vmul.f32 %v785, %v763
        %v788 = vmul.f32 %v785, %v764
        %v789 = vmul.f32 %v786, %v659
        %v790 = vmul.f32 %v787, %v660
        %v791 = vadd.f32 %v789, %v790
        %v792 = vmul.f32 %v788, %v661
        %v793 = vadd.f32 %v791, %v792
        %v794 = vsub.f32 0.0, %v793
        %v795 = vmul.f32 %v773, %v659
        %v796 = vmul.f32 %v776, %v660
        %v797 = vadd.f32 %v795, %v796
        %v798 = vmul.f32 %v779, %v661
        %v799 = vadd.f32 %v797, %v798
        %v800 = vmul.f32 %v773, %v765
        %v801 = vmul.f32 %v776, %v766
        %v802 = vadd.f32 %v800, %v801
        %v803 = vmul.f32 %v779, %v767
        %v804 = vadd.f32 %v802, %v803
        %v805 = vsub.f32 0.0, %v804
        %v806 = vmul.f32 %v786, %v669
        %v807 = vmul.f32 %v787, %v670
        %v808 = vadd.f32 %v806, %v807
        %v809 = vmul.f32 %v788, %v671
        %v810 = vadd.f32 %v808, %v809
        %v811 = vmul.f32 %v799, %v805
        %v812 = vsub.f32 %v810, %v811
        %v813 = vsub.f32 0.0, %v812
        %v814 = vmul.f32 %v773, %v669
        %v815 = vmul.f32 %v776, %v670
        %v816 = vadd.f32 %v814, %v815
        %v817 = vmul.f32 %v779, %v671
        %v818 = vadd.f32 %v816, %v817
        %v819 = vmul.f32 %v794, %v805
        %v820 = vsub.f32 %v818, %v819
        %v821 = vmul.f32 %v773, %v768
        %v822 = vmul.f32 %v776, %v769
        %v823 = vadd.f32 %v821, %v822
        %v824 = vmul.f32 %v779, %v770
        %v825 = vadd.f32 %v823, %v824
        %v826 = vmul.f32 %v794, %v799
        %v827 = vsub.f32 %v825, %v826
        %v828 = vsub.f32 0.0, %v827
        %v829 = vmul.f32 %v786, %v521
        %v830 = vmul.f32 %v787, %v523
        %v831 = vadd.f32 %v829, %v830
        %v832 = vmul.f32 %v788, %v526
        %v833 = vadd.f32 %v831, %v832
        %v834 = vmul.f32 %v514, %v649
        %v835 = vmul.f32 %v517, %v650
        %v836 = vadd.f32 %v834, %v835
        %v837 = vmul.f32 %v519, %v651
        %v838 = vadd.f32 %v836, %v837
        %v839 = vsub.f32 %v833, %v838
        %v840 = vmul.f32 %v773, %v521
        %v841 = vmul.f32 %v776, %v523
        %v842 = vadd.f32 %v840, %v841
        %v843 = vmul.f32 %v779, %v526
        %v844 = vadd.f32 %v842, %v843
        %v845 = vmul.f32 %v508, %v649
        %v846 = vmul.f32 %v510, %v650
        %v847 = vadd.f32 %v845, %v846
        %v848 = vmul.f32 %v512, %v651
        %v849 = vadd.f32 %v847, %v848
        %v850 = vsub.f32 %v844, %v849
        %v851 = vmul.f32 %v773, %v514
        %v852 = vmul.f32 %v776, %v517
        %v853 = vadd.f32 %v851, %v852
        %v854 = vmul.f32 %v779, %v519
        %v855 = vadd.f32 %v853, %v854
        %v856 = vmul.f32 %v508, %v786
        %v857 = vmul.f32 %v510, %v787
        %v858 = vadd.f32 %v856, %v857
        %v859 = vmul.f32 %v512, %v788
        %v860 = vadd.f32 %v858, %v859
        %v861 = vsub.f32 %v855, %v860
        %v862 = vmul.f32 %v839, -0.5
        %v863 = vmul.f32 %v850, 0.5
        %v864 = vmul.f32 %v861, -0.5
        %v865 = vmul.f32 %v794, %v773
        %v866 = vmul.f32 %v794, %v776
        %v867 = vmul.f32 %v794, %v779
        %v868 = vmul.f32 %v799, %v786
        %v869 = vmul.f32 %v799, %v787
        %v870 = vmul.f32 %v799, %v788
        %v871 = vmul.f32 %v805, %v649
        %v872 = vmul.f32 %v805, %v650
        %v873 = vmul.f32 %v805, %v651
        %v874 = vadd.f32 %v865, 0.0
        %v875 = vadd.f32 %v874, %v868
        %v876 = vadd.f32 %v875, %v871
        %v877 = vadd.f32 %v866, 0.0
        %v878 = vadd.f32 %v877, %v869
        %v879 = vadd.f32 %v878, %v872
        %v880 = vadd.f32 %v867, 0.0
        %v881 = vadd.f32 %v880, %v870
        %v882 = vadd.f32 %v881, %v873
        %v883 = vmul.f32 %v813, %v773
        %v884 = vmul.f32 %v813, %v776
        %v885 = vmul.f32 %v813, %v779
        %v886 = vmul.f32 %v820, %v786
        %v887 = vmul.f32 %v820, %v787
        %v888 = vmul.f32 %v820, %v788
        %v889 = vmul.f32 %v828, %v649
        %v890 = vmul.f32 %v828, %v650
        %v891 = vmul.f32 %v828, %v651
        %v892 = vadd.f32 %v883, 0.0
        %v893 = vadd.f32 %v892, %v886
        %v894 = vadd.f32 %v893, %v889
        %v895 = vadd.f32 %v884, 0.0
        %v896 = vadd.f32 %v895, %v887
        %v897 = vadd.f32 %v896, %v890
        %v898 = vadd.f32 %v885, 0.0
        %v899 = vadd.f32 %v898, %v888
        %v900 = vadd.f32 %v899, %v891
        %v901 = vmul.f32 %v508, %v876
        %v902 = vmul.f32 %v510, %v879
        %v903 = vadd.f32 %v901, %v902
        %v904 = vmul.f32 %v512, %v882
        %v905 = vadd.f32 %v903, %v904
        %v906 = vmul.f32 %v514, %v876
        %v907 = vmul.f32 %v517, %v879
        %v908 = vadd.f32 %v906, %v907
        %v909 = vmul.f32 %v519, %v882
        %v910 = vadd.f32 %v908, %v909
        %v911 = vmul.f32 %v521, %v876
        %v912 = vmul.f32 %v523, %v879
        %v913 = vadd.f32 %v911, %v912
        %v914 = vmul.f32 %v526, %v882
        %v915 = vadd.f32 %v913, %v914
        %v916 = vmul.f32 %v508, %v894
        %v917 = vmul.f32 %v510, %v897
        %v918 = vadd.f32 %v916, %v917
        %v919 = vmul.f32 %v512, %v900
        %v920 = vadd.f32 %v918, %v919
        %v921 = vmul.f32 %v514, %v894
        %v922 = vmul.f32 %v517, %v897
        %v923 = vadd.f32 %v921, %v922
        %v924 = vmul.f32 %v519, %v900
        %v925 = vadd.f32 %v923, %v924
        %v926 = vmul.f32 %v521, %v894
        %v927 = vmul.f32 %v523, %v897
        %v928 = vadd.f32 %v926, %v927
        %v929 = vmul.f32 %v526, %v900
        %v930 = vadd.f32 %v928, %v929
        %v931 = vsub.f32 %v445, %v905
        %v932 = vsub.f32 %v447, %v910
        %v933 = vsub.f32 %v449, %v915
        %v934 = vstv %s416
        %v935 = vmul.f32 %v934, %v445
        %v936 = vstv %s417
        %v937 = vmul.f32 %v936, %v447
        %v938 = vadd.f32 %v935, %v937
        %v939 = vstv %s418
        %v940 = vmul.f32 %v939, %v449
        %v941 = vadd.f32 %v938, %v940
        %v942 = vstv %s419
        %v943 = vmul.f32 %v942, %v445
        %v944 = vstv %s420
        %v945 = vmul.f32 %v944, %v447
        %v946 = vadd.f32 %v943, %v945
        %v947 = vstv %s421
        %v948 = vmul.f32 %v947, %v449
        %v949 = vadd.f32 %v946, %v948
        %v950 = vstv %s422
        %v951 = vmul.f32 %v950, %v445
        %v952 = vstv %s423
        %v953 = vmul.f32 %v952, %v447
        %v954 = vadd.f32 %v951, %v953
        %v955 = vstv %s424
        %v956 = vmul.f32 %v955, %v449
        %v957 = vadd.f32 %v954, %v956
        %v958 = vstv %s411
        %v959 = vmul.f32 %v958, %v862
        %v960 = vmul.f32 %v958, %v863
        %v961 = vmul.f32 %v958, %v864
        %v962 = vstv %s412
        %v963 = vmul.f32 %v962, %v931
        %v964 = vmul.f32 %v962, %v932
        %v965 = vmul.f32 %v962, %v933
        %v966 = vadd.f32 %v959, 0.0
        %v967 = vadd.f32 %v966, %v963
        %v968 = vadd.f32 %v960, 0.0
        %v969 = vadd.f32 %v968, %v964
        %v970 = vadd.f32 %v961, 0.0
        %v971 = vadd.f32 %v970, %v965
        %v972 = vsub.f32 0.0, %v967
        %v973 = vsub.f32 0.0, %v969
        %v974 = vsub.f32 0.0, %v971
        %v975 = vmul.f32 %v447, %v957
        %v976 = vmul.f32 %v449, %v949
        %v977 = vsub.f32 %v975, %v976
        %v978 = vmul.f32 %v449, %v941
        %v979 = vmul.f32 %v445, %v957
        %v980 = vsub.f32 %v978, %v979
        %v981 = vmul.f32 %v445, %v949
        %v982 = vmul.f32 %v447, %v941
        %v983 = vsub.f32 %v981, %v982
        %v984 = vadd.f32 %v972, 0.0
        %v985 = vadd.f32 %v984, %v977
        %v986 = vadd.f32 %v973, 0.0
        %v987 = vadd.f32 %v986, %v980
        %v988 = vadd.f32 %v974, 0.0
        %v989 = vadd.f32 %v988, %v983
        %v990 = vsub.f32 %v905, %v920
        %v991 = vsub.f32 %v910, %v925
        %v992 = vsub.f32 %v915, %v930
        %v993 = vmul.f32 %v447, %v992
        %v994 = vmul.f32 %v449, %v991
        %v995 = vsub.f32 %v993, %v994
        %v996 = vmul.f32 %v449, %v990
        %v997 = vmul.f32 %v445, %v992
        %v998 = vsub.f32 %v996, %v997
        %v999 = vmul.f32 %v445, %v991
        %v1000 = vmul.f32 %v447, %v990
        %v1001 = vsub.f32 %v999, %v1000
        %v1002 = vmul.f32 %v934, %v995
        %v1003 = vmul.f32 %v936, %v998
        %v1004 = vadd.f32 %v1002, %v1003
        %v1005 = vmul.f32 %v939, %v1001
        %v1006 = vadd.f32 %v1004, %v1005
        %v1007 = vmul.f32 %v942, %v995
        %v1008 = vmul.f32 %v944, %v998
        %v1009 = vadd.f32 %v1007, %v1008
        %v1010 = vmul.f32 %v947, %v1001
        %v1011 = vadd.f32 %v1009, %v1010
        %v1012 = vmul.f32 %v950, %v995
        %v1013 = vmul.f32 %v952, %v998
        %v1014 = vadd.f32 %v1012, %v1013
        %v1015 = vmul.f32 %v955, %v1001
        %v1016 = vadd.f32 %v1014, %v1015
        %v1017 = vsub.f32 %v985, %v1006
        %v1018 = vsub.f32 %v987, %v1011
        %v1019 = vsub.f32 %v989, %v1016
        %v1020 = vmax.f32 %v564, 0.0
        %1021 = vst [vmem:[%s408] sm:$0xff] %v1020
        %s1022 = scalar_lea.vmem %s408, 8 [#allocation6]
        %1023 = vst [vmem:[%s1022] sm:$0xff] %v1017
        %s1024 = scalar_lea.vmem %s408, 16 [#allocation6]
        %1025 = vst [vmem:[%s1024] sm:$0xff] %v1018
        %s1026 = scalar_lea.vmem %s408, 24 [#allocation6]
        %1027 = vst [vmem:[%s1026] sm:$0xff] %v1019
        %s1028 = sand.u32 %s96, 1
        %s1029 = sand.u32 %s96, 1
        %s1030 = smul.addr %s1029, 32
        %s1031 = scalar_lea.vmem [#allocation6], %s1030
        // Predicated region
        $region113: #{geometric_controller_soa.1} parent=99 // pred_check
          %p1032 = pneg %p106
        $region114: #{geometric_controller_soa.1} parent=99 // pred_check_branch
          %1034 = sbr.rel (%p1032) target = $region116
        $region115: #{geometric_controller_soa.1} parent=99 // pred_region
          %s1035 = smul.addr %s15, 8
          %s1036 = scalar_lea.vmem %s3, %s1035
          // Predicated region
          $region117: #{geometric_controller_soa.1} parent=115 // pred_check
            _
          $region118: #{geometric_controller_soa.1} parent=115 // pred_check_branch
            %1038 = sbr.rel (0) target = $region120
          $region119: #{geometric_controller_soa.1} parent=115 // pred_region
            // Predicated region
            $region121: #{geometric_controller_soa.1} parent=119 // pred_check
              _
            $region122: #{geometric_controller_soa.1} parent=119 // pred_check_branch
              %1040 = sbr.rel (0) target = $region124
            $region123: #{geometric_controller_soa.1} parent=119 // pred_region
              // Predicated region
              $region136: #{geometric_controller_soa.1} parent=123 // pred_check
                _
              $region137: #{geometric_controller_soa.1} parent=123 // pred_check_branch
                %1062 = sbr.rel (0) target = $region139
              $region138: #{geometric_controller_soa.1} parent=123 // pred_region
                loop: start=0, step=1, limit=1
                $region140: #{geometric_controller_soa.1} parent=138 // loop_pre_header
                  _
                $region141: #{geometric_controller_soa.1} parent=138 // loop_header
                  %s1064 = sphi 0, %s1068
                  %p1065 = scmp.ge.s32.totalorder %s1064, 1
                  %s1069 = sphi %s1031, %s1031
                  %s1070 = sphi %s1036, %s1036
                $region142: #{geometric_controller_soa.1} parent=138 // loop_header_branch
                  %1067 = sbr.rel (%p1065) target = $region146
                $region143: #{geometric_controller_soa.1} parent=138 // loop_body
                  %v1071 = vld [vmem:[%s1069] sm:$0xff]
                  %1072 = vst [vmem:[%s1070] sm:$0xff] %v1071
                  %v1073 = vld [vmem:[%s1069 + $0x8] sm:$0xff]
                  %1074 = vst [vmem:[%s1070 + $0x10] sm:$0xff] %v1073
                  %v1075 = vld [vmem:[%s1069 + $0x10] sm:$0xff]
                  %1076 = vst [vmem:[%s1070 + $0x20] sm:$0xff] %v1075
                  %v1077 = vld [vmem:[%s1069 + $0x18] sm:$0xff]
                  %1078 = vst [vmem:[%s1070 + $0x30] sm:$0xff] %v1077
                $region144: #{geometric_controller_soa.1} parent=138 // loop_footer
                  %s1068 = sadd.s32 1, %s1064
                $region145: #{geometric_controller_soa.1} parent=138 // loop_footer_branch
                  %1063 = sbr.rel target = $region141
                $region146: #{geometric_controller_soa.1} parent=138 // loop_exit
                  _
              $region139: #{geometric_controller_soa.1} parent=123 // pred_fallthru
                _
              // Predicated region
              $region147: #{geometric_controller_soa.1} parent=123 // pred_check
                _
              $region148: #{geometric_controller_soa.1} parent=123 // pred_check_branch
                %1080 = sbr.rel target = $region150
              $region149: #{geometric_controller_soa.1} parent=123 // pred_region
                _
              $region150: #{geometric_controller_soa.1} parent=123 // pred_fallthru
                _
            $region124: #{geometric_controller_soa.1} parent=119 // pred_fallthru
              _
            // Predicated region
            $region125: #{geometric_controller_soa.1} parent=119 // pred_check
              _
            $region126: #{geometric_controller_soa.1} parent=119 // pred_check_branch
              %1042 = sbr.rel target = $region128
            $region127: #{geometric_controller_soa.1} parent=119 // pred_region
              %s1044 = ssub.s32 256, 1
              loop: start=0, step=1, limit=1
              $region129: #{geometric_controller_soa.1} parent=127 // loop_pre_header
                _
              $region130: #{geometric_controller_soa.1} parent=127 // loop_header
                %s1046 = sphi 0, %s1050
                %p1047 = scmp.ge.s32.totalorder %s1046, 1
                %s1051 = sphi %s1031, %s1031
                %s1052 = sphi %s1036, %s1036
              $region131: #{geometric_controller_soa.1} parent=127 // loop_header_branch
                %1049 = sbr.rel (%p1047) target = $region135
              $region132: #{geometric_controller_soa.1} parent=127 // loop_body
                %v1053 = vld [vmem:[%s1051] sm:%s1044]
                %1054 = vst [vmem:[%s1052] sm:%s1044] %v1053
                %v1055 = vld [vmem:[%s1051 + $0x8] sm:%s1044]
                %1056 = vst [vmem:[%s1052 + $0x10] sm:%s1044] %v1055
                %v1057 = vld [vmem:[%s1051 + $0x10] sm:%s1044]
                %1058 = vst [vmem:[%s1052 + $0x20] sm:%s1044] %v1057
                %v1059 = vld [vmem:[%s1051 + $0x18] sm:%s1044]
                %1060 = vst [vmem:[%s1052 + $0x30] sm:%s1044] %v1059
              $region133: #{geometric_controller_soa.1} parent=127 // loop_footer
                %s1050 = sadd.s32 1, %s1046
              $region134: #{geometric_controller_soa.1} parent=127 // loop_footer_branch
                %1045 = sbr.rel target = $region130
              $region135: #{geometric_controller_soa.1} parent=127 // loop_exit
                _
            $region128: #{geometric_controller_soa.1} parent=119 // pred_fallthru
              _
          $region120: #{geometric_controller_soa.1} parent=115 // pred_fallthru
            _
          %1081 = vnop
        $region116: #{geometric_controller_soa.1} parent=99 // pred_fallthru
          _
      $region100: #{geometric_controller_soa.1} parent=5 // pred_fallthru
        _
      %p1082 = scmp.le.s32.totalorder 2, %s10
      // Predicated region
      $region151: #{geometric_controller_soa.1} parent=5 // pred_check
        %p1083 = pneg %p1082
      $region152: #{geometric_controller_soa.1} parent=5 // pred_check_branch
        %1085 = sbr.rel (%p1083) target = $region154
      $region153: #{geometric_controller_soa.1} parent=5 // pred_region
        %s1086 = ssub.s32 %s10, 2
        // Predicated region
        $region155: #{geometric_controller_soa.1} parent=153 // pred_check
          %p1087 = pneg %p112
        $region156: #{geometric_controller_soa.1} parent=153 // pred_check_branch
          %1089 = sbr.rel (%p1087) target = $region158
        $region157: #{geometric_controller_soa.1} parent=153 // pred_region
          %s1090 = sand.u32 %s97, 1
          %s1091 = sand.u32 %s97, 1
          %s1092 = smul.addr %s1091, 32
          %s1093 = scalar_lea.vmem [#allocation6], %s1092
        $region158: #{geometric_controller_soa.1} parent=153 // pred_fallthru
          _
      $region154: #{geometric_controller_soa.1} parent=5 // pred_fallthru
        _
    $region6: #{geometric_controller_soa.1} parent=1 // loop_footer
      %s14 = sadd.s32 1, %s10
    $region7: #{geometric_controller_soa.1} parent=1 // loop_footer_branch
      %9 = sbr.rel target = $region3
    $region8: #{geometric_controller_soa.1} parent=1 // loop_exit
      _
    %1094 = vsyncpa [#allocation3], 1
    %s1095 = scalar_lea.sflag [#allocation3], 1
    %1096 = vsyncpa %s1095, 1

</llo_original>
